<compile_context>
chip_gen: v5e
topology: v5e:2x2
jax: 0.10.0
libtpu: 0.0.40
codegen_flags: <defaults>
</compile_context>

<pallas_src>
import functools

import jax
import jax.numpy as jnp
from jax.experimental import pallas as pl
from jax.experimental.pallas import tpu as pltpu


def _light_head_kernel(x_ref, w_ref, b_ref, out_ref, pool_acc, *, tn, rem, acc_l):
    """One (batch-tile, N-tile) grid step.

    x_ref    : (TB, in_dim, TN)      current N-chunk of this batch tile
    w_ref    : (in_dim, C_pad)       folded conv1*bn1*conv2*bn2 weight
    b_ref    : (1, C_pad)            folded bias
    out_ref  : (TB, C_pad)           output tile (resident across the N axis)
    pool_acc : (TB, in_dim, acc_l)   f32 running max over N (VMEM scratch)
    """
    k = pl.program_id(1)
    n_k = pl.num_programs(1)

    @pl.when(k == 0)
    def _init():
        pool_acc[...] = jnp.full(pool_acc.shape, -jnp.inf, dtype=pool_acc.dtype)

    x = x_ref[...]                                     # (TB, in_dim, TN)

    if rem:
        # Last N-chunk is partial: Pallas block padding is unspecified, so mask
        # the out-of-range tail to -inf before it can win the max.
        lane = jax.lax.broadcasted_iota(jnp.int32, x.shape, 2)
        limit = jnp.where(k == n_k - 1, rem, tn)
        x = jnp.where(lane < limit, x, jnp.array(-jnp.inf, x.dtype))

    acc = pool_acc[...]
    if acc_l > 1:
        # Running max kept as 128-lane groups: per-chunk work is pure VPU
        # elementwise maxima; the single cross-lane (XLU) reduce happens once,
        # at finalize.
        for g in range(tn // acc_l):
            acc = jnp.maximum(
                acc, x[:, :, g * acc_l:(g + 1) * acc_l].astype(jnp.float32))
    else:
        acc = jnp.maximum(
            acc, jnp.max(x, axis=-1, keepdims=True).astype(jnp.float32))
    pool_acc[...] = acc

    # Whole folded head = single matmul + bias, done once per batch tile.
    @pl.when(k == n_k - 1)
    def _finalize():
        pooled = jnp.max(pool_acc[...], axis=-1)       # (TB, in_dim) — one XLU reduce
        out_ref[...] = (
            jnp.dot(pooled, w_ref[...], preferred_element_type=jnp.float32)
            + b_ref[...]
        ).astype(out_ref.dtype)


def _round_up(a, m):
    return (a + m - 1) // m * m


def _vmem_capacity_bytes():
    try:
        return int(pltpu.get_tpu_info().vmem_capacity_bytes)
    except Exception:
        return 64 << 20          # conservative default (v7x per-TC size)


def _pick_tiles(b_rows, in_dim, n, itemsize, x_budget_bytes):
    """Pick (TB, TN): biggest tiles whose double-buffered x block fits budget."""
    # ---- N tile: full extent when small, else 512 (tail handled by masking).
    tn = n if n <= 512 else 512

    # ---- Batch tile.
    if b_rows % 8 != 0:            # tiny batch (<8): full-extent block (exempt)
        return b_rows, tn

    # Keep >= 2 batch tiles when B >= 16 so the "parallel" axis can actually be
    # megacore-sharded on v7x; harmless on single-TC v5e/v6e.
    max_tb = b_rows // 2 if b_rows >= 16 else b_rows
    max_tb = max(8, (max_tb // 8) * 8)

    tb = 8
    for cand in (512, 256, 128, 64, 32, 16, 8):
        if cand <= max_tb and b_rows % cand == 0:
            tb = cand
            break

    def blk_bytes(tb_, tn_):
        return 2 * tb_ * in_dim * tn_ * itemsize       # double-buffered x block

    while tb > 8 and blk_bytes(tb, tn) > x_budget_bytes:
        tb //= 2
    # If TB=8 still exceeds the budget, shrink the N tile (kept a 128-multiple).
    while tn > 128 and tn % 128 == 0 and blk_bytes(tb, tn) > x_budget_bytes:
        tn //= 2
    return tb, tn


def light_head_forward(x, params, *, x_dtype=jnp.bfloat16):
    """x: (B, in_dim, N) -> (B, num_classes) float32 (eval-mode LightHead)."""
    B, in_dim, N = x.shape
    eps = 1e-5
    f32 = jnp.float32

    # ---- Fold BN (inference) into per-channel scale/shift, then collapse the
    # ---- whole conv1+bn1 -> conv2+bn2 chain into one affine map (plain JAX). --
    def fold_bn(gamma, beta, mean, var):
        scale = gamma.astype(f32) / jnp.sqrt(var.astype(f32) + eps)
        shift = beta.astype(f32) - mean.astype(f32) * scale
        return scale, shift

    s1, t1 = fold_bn(params["bn1_gamma"], params["bn1_beta"],
                     params["bn1_mean"], params["bn1_var"])
    s2, t2 = fold_bn(params["bn2_gamma"], params["bn2_beta"],
                     params["bn2_mean"], params["bn2_var"])

    w1s = params["w1"].T.astype(f32) * s1                  # (in_dim, 128)
    w2s = params["w2"].T.astype(f32) * s2                  # (128, num_classes)
    w_eff = w1s @ w2s                                      # (in_dim, num_classes)
    b_eff = (params["b1"].astype(f32) * s1 + t1) @ w2s \
        + params["b2"].astype(f32) * s2 + t2               # (num_classes,)
    num_classes = w_eff.shape[1]

    # ---- Pad to lane/sublane-friendly shapes --------------------------------
    c_pad = _round_up(num_classes, 128)                    # lane-dense output store
    w_eff_pad = jnp.zeros((in_dim, c_pad), f32).at[:, :num_classes].set(w_eff)
    b_eff_pad = jnp.zeros((1, c_pad), f32).at[:, :num_classes].set(b_eff[None, :])

    b_rows = B if (B % 8 == 0 or B < 8) else _round_up(B, 8)
    x_in = x.astype(x_dtype)        # bf16 streaming halves HBM bytes for x
    if b_rows != B:
        x_in = jnp.pad(x_in, ((0, b_rows - B), (0, 0), (0, 0)))  # sliced away below

    # ---- Generation-aware tiling / VMEM budget -------------------------------
    vmem_cap = _vmem_capacity_bytes()
    x_budget = max(8 << 20, int(vmem_cap * 0.35))
    itemsize = jnp.dtype(x_dtype).itemsize
    tb, tn = _pick_tiles(b_rows, in_dim, N, itemsize, x_budget)

    n_chunks = pl.cdiv(N, tn)
    rem = N % tn                      # 0 when N is a tile multiple (or tn == N)

    # Wide (128-lane) running-max accumulator keeps the streaming phase on the
    # VPU; fall back to a 1-lane accumulator when there is only one chunk or
    # the wide one would waste VMEM better spent on x blocks.
    if n_chunks > 1 and tn % 128 == 0 and tb * in_dim * 128 * 4 <= (4 << 20):
        acc_l = 128
    else:
        acc_l = 1

    # VMEM estimate: double-buffered x blocks + weights + bias + out + scratch.
    est = (2 * tb * in_dim * tn * itemsize
           + 2 * (in_dim * c_pad + c_pad) * 4
           + 2 * tb * c_pad * 4
           + tb * in_dim * acc_l * 4)
    vmem_limit = min(int(vmem_cap * 0.75),
                     max(16 << 20, int(est * 1.5) + (2 << 20)))

    grid = (b_rows // tb, n_chunks)   # reduction (N) axis last / innermost

    kernel = functools.partial(_light_head_kernel, tn=tn, rem=rem, acc_l=acc_l)
    # TODO(synk): pipeline_mode=pl.Buffered(1) on the constant w/b specs would
    # shave a little VMEM on v7x; omitted to keep the call maximally portable.

    out_padded = pl.pallas_call(
        kernel,
        out_shape=jax.ShapeDtypeStruct((b_rows, c_pad), f32),
        grid=grid,
        in_specs=[
            pl.BlockSpec((tb, in_dim, tn), lambda i, k: (i, 0, k)),
            pl.BlockSpec((in_dim, c_pad), lambda i, k: (0, 0)),
            pl.BlockSpec((1, c_pad), lambda i, k: (0, 0)),
        ],
        out_specs=pl.BlockSpec((tb, c_pad), lambda i, k: (i, 0)),
        scratch_shapes=[pltpu.VMEM((tb, in_dim, acc_l), f32)],
        compiler_params=pltpu.CompilerParams(
            dimension_semantics=("parallel", "arbitrary"),
            vmem_limit_bytes=vmem_limit),
    )(x_in, w_eff_pad, b_eff_pad)

    return out_padded[:B, :num_classes]


def make_params(key, in_dim, num_classes):
    hidden = 128
    k1, k2, k3, k4 = jax.random.split(key, 4)
    params = {
        # Conv1d(in_dim, 128, 1): weight (128, in_dim, 1) -> stored as (128, in_dim)
        "w1": 0.1 * jax.random.normal(k1, (hidden, in_dim), jnp.float32),
        "b1": 0.05 * jax.random.normal(k2, (hidden,), jnp.float32),
        # Conv1d(128, num_classes, 1)
        "w2": 0.1 * jax.random.normal(k3, (num_classes, hidden), jnp.float32),
        "b2": 0.05 * jax.random.normal(k4, (num_classes,), jnp.float32),
        # BatchNorm1d(128) — deterministic non-trivial running stats
        "bn1_gamma": 1.0 + 0.01 * jnp.arange(hidden, dtype=jnp.float32),
        "bn1_beta": 0.02 * jnp.arange(hidden, dtype=jnp.float32),
        "bn1_mean": 0.01 * jnp.arange(hidden, dtype=jnp.float32),
        "bn1_var": 1.0 + 0.005 * jnp.arange(hidden, dtype=jnp.float32),
        # BatchNorm1d(num_classes)
        "bn2_gamma": 1.0 + 0.01 * jnp.arange(num_classes, dtype=jnp.float32),
        "bn2_beta": 0.02 * jnp.arange(num_classes, dtype=jnp.float32),
        "bn2_mean": 0.01 * jnp.arange(num_classes, dtype=jnp.float32),
        "bn2_var": 1.0 + 0.005 * jnp.arange(num_classes, dtype=jnp.float32),
    }
    return params


def reference_forward(x, params):
    """Pure-JAX reference mirroring the PyTorch eval-mode forward."""
    eps = 1e-5
    pooled = jnp.max(x, axis=-1)                                   # (B, in_dim)
    h = pooled @ params["w1"].T + params["b1"]
    h = (h - params["bn1_mean"]) / jnp.sqrt(params["bn1_var"] + eps) \
        * params["bn1_gamma"] + params["bn1_beta"]
    o = h @ params["w2"].T + params["b2"]
    o = (o - params["bn2_mean"]) / jnp.sqrt(params["bn2_var"] + eps) \
        * params["bn2_gamma"] + params["bn2_beta"]
    return o


if __name__ == "__main__":
    key = jax.random.PRNGKey(0)
    kx, kp = jax.random.split(key)

    # Small but representative PointNet-head shapes.  N=1000 exercises the
    # cdiv-tiled N-reduction with a masked tail chunk (tn=512, rem=488), and
    # B=16 gives two batch tiles (tb=8) on the "parallel" axis.
    B, in_dim, N = 16, 64, 1000
    num_classes = 16

    x = jax.random.normal(kx, (B, in_dim, N), jnp.float32)
    params = make_params(kp, in_dim, num_classes)

    ref = reference_forward(x, params)

    # Default path: bf16 streaming (halves HBM bytes for x).  Compared against
    # the same math on bf16-rounded inputs, so the only residual delta is f32
    # re-association inside the folded matmul.
    out = jax.block_until_ready(light_head_forward(x, params))
    assert out.shape == (B, num_classes)
    ref_bf16 = reference_forward(x.astype(jnp.bfloat16).astype(jnp.float32), params)
    assert jnp.allclose(out, ref_bf16, atol=1e-3, rtol=1e-3), \
        "bf16 mismatch vs bf16-rounded reference"

    # f32 path — tight tolerance vs eval-mode PyTorch math (only float
    # re-association from the constant-folded affine collapse).
    out_f32 = jax.block_until_ready(
        light_head_forward(x, params, x_dtype=jnp.float32))
    assert jnp.allclose(out_f32, ref, atol=1e-4, rtol=1e-4), \
        "f32 mismatch vs reference"

    # Tiny odd shape: B not a multiple of 8 and N < 128 (full-extent blocks,
    # single N-chunk, 1-lane accumulator path).
    B2, D2, N2, C2 = 5, 32, 96, 10
    x2 = jax.random.normal(jax.random.PRNGKey(1), (B2, D2, N2), jnp.float32)
    p2 = make_params(jax.random.PRNGKey(2), D2, C2)
    out2 = jax.block_until_ready(light_head_forward(x2, p2, x_dtype=jnp.float32))
    assert out2.shape == (B2, C2)
    assert jnp.allclose(out2, reference_forward(x2, p2), atol=1e-4, rtol=1e-4), \
        "small-shape mismatch vs reference"

    print("KERNEL_OK")
</pallas_src>

<mosaic_0001>
module attributes {stable_mosaic.version = 11 : i64} {
  func.func @_light_head_kernel(%arg0: i32, %arg1: i32, %arg2: memref<8x64x512xbf16, #tpu.memory_space<vmem>>, %arg3: memref<64x128xf32, #tpu.memory_space<vmem>>, %arg4: memref<1x128xf32, #tpu.memory_space<vmem>>, %arg5: memref<8x128xf32, #tpu.memory_space<vmem>>, %arg6: memref<8x64x128xf32, #tpu.memory_space<vmem>>) attributes {dimension_semantics = [#tpu.dimension_semantics<parallel>, #tpu.dimension_semantics<arbitrary>], iteration_bounds = array<i64: 2, 2>, scalar_prefetch = 0 : i64, scratch_operands = 1 : i64, tpu.core_type = #tpu.core_type<tc>, window_params = [{transform_indices = @transform_0, window_bounds = array<i64: 8, 64, 512>}, {pipeline_mode = #tpu.pipeline_mode<synchronous>, transform_indices = @transform_1, window_bounds = array<i64: 64, 128>}, {pipeline_mode = #tpu.pipeline_mode<synchronous>, transform_indices = @transform_2, window_bounds = array<i64: 1, 128>}, {transform_indices = @transform_3, window_bounds = array<i64: 8, 128>}]} {
    %c0_i32 = arith.constant 0 : i32
    %0 = arith.cmpi eq, %arg1, %c0_i32 : i32
    %1 = arith.extui %0 : i1 to i32
    %c0_i32_0 = arith.constant 0 : i32
    %2 = arith.cmpi ne, %1, %c0_i32_0 : i32
    scf.if %2 {
      %cst_11 = arith.constant 0xFF800000 : f32
      %28 = vector.broadcast %cst_11 : f32 to vector<8x64x128xf32>
      %c0_12 = arith.constant 0 : index
      %c0_13 = arith.constant 0 : index
      %c0_14 = arith.constant 0 : index
      %29 = vector.load %arg6[%c0_12, %c0_13, %c0_14] : memref<8x64x128xf32, #tpu.memory_space<vmem>>, vector<8x64x128xf32>
      tpu.vector_store %arg6[%c0_12, %c0_13, %c0_14], %28 {strides = array<i32>} : memref<8x64x128xf32, #tpu.memory_space<vmem>>, vector<8x64x128xf32>,
    } else {
    }
    %c0 = arith.constant 0 : index
    %c0_1 = arith.constant 0 : index
    %c0_2 = arith.constant 0 : index
    %3 = vector.load %arg2[%c0, %c0_1, %c0_2] : memref<8x64x512xbf16, #tpu.memory_space<vmem>>, vector<8x64x512xbf16>
    %4 = tpu.iota {dimensions = array<i32: 2>} : vector<8x64x512xi32>
    %c1_i32 = arith.constant 1 : i32
    %5 = arith.cmpi eq, %arg1, %c1_i32 : i32
    %c488_i32 = arith.constant 488 : i32
    %c512_i32 = arith.constant 512 : i32
    %6 = arith.select %5, %c488_i32, %c512_i32 : i32
    %7 = vector.broadcast %6 : i32 to vector<8x64x512xi32>
    %8 = arith.cmpi slt, %4, %7 : vector<8x64x512xi32>
    %cst = arith.constant 0xFF80 : bf16
    %9 = vector.broadcast %cst : bf16 to vector<8x64x512xbf16>
    %10 = arith.select %8, %3, %9 : vector<8x64x512xi1>, vector<8x64x512xbf16>
    %c0_3 = arith.constant 0 : index
    %c0_4 = arith.constant 0 : index
    %c0_5 = arith.constant 0 : index
    %11 = vector.load %arg6[%c0_3, %c0_4, %c0_5] : memref<8x64x128xf32, #tpu.memory_space<vmem>>, vector<8x64x128xf32>
    %12 = vector.extract_strided_slice %10 {offsets = [0, 0, 0], sizes = [8, 64, 128], strides = [1, 1, 1]} : vector<8x64x512xbf16> to vector<8x64x128xbf16>
    %13 = arith.extf %12 : vector<8x64x128xbf16> to vector<8x64x128xf32>
    %14 = arith.maximumf %11, %13 : vector<8x64x128xf32>
    %15 = vector.extract_strided_slice %10 {offsets = [0, 0, 128], sizes = [8, 64, 128], strides = [1, 1, 1]} : vector<8x64x512xbf16> to vector<8x64x128xbf16>
    %16 = arith.extf %15 : vector<8x64x128xbf16> to vector<8x64x128xf32>
    %17 = arith.maximumf %14, %16 : vector<8x64x128xf32>
    %18 = vector.extract_strided_slice %10 {offsets = [0, 0, 256], sizes = [8, 64, 128], strides = [1, 1, 1]} : vector<8x64x512xbf16> to vector<8x64x128xbf16>
    %19 = arith.extf %18 : vector<8x64x128xbf16> to vector<8x64x128xf32>
    %20 = arith.maximumf %17, %19 : vector<8x64x128xf32>
    %21 = vector.extract_strided_slice %10 {offsets = [0, 0, 384], sizes = [8, 64, 128], strides = [1, 1, 1]} : vector<8x64x512xbf16> to vector<8x64x128xbf16>
    %22 = arith.extf %21 : vector<8x64x128xbf16> to vector<8x64x128xf32>
    %23 = arith.maximumf %20, %22 : vector<8x64x128xf32>
    %c0_6 = arith.constant 0 : index
    %c0_7 = arith.constant 0 : index
    %c0_8 = arith.constant 0 : index
    %24 = vector.load %arg6[%c0_6, %c0_7, %c0_8] : memref<8x64x128xf32, #tpu.memory_space<vmem>>, vector<8x64x128xf32>
    tpu.vector_store %arg6[%c0_6, %c0_7, %c0_8], %23 {strides = array<i32>} : memref<8x64x128xf32, #tpu.memory_space<vmem>>, vector<8x64x128xf32>,
    %c1_i32_9 = arith.constant 1 : i32
    %25 = arith.cmpi eq, %arg1, %c1_i32_9 : i32
    %26 = arith.extui %25 : i1 to i32
    %c0_i32_10 = arith.constant 0 : i32
    %27 = arith.cmpi ne, %26, %c0_i32_10 : i32
    scf.if %27 {
      %c0_11 = arith.constant 0 : index
      %c0_12 = arith.constant 0 : index
      %c0_13 = arith.constant 0 : index
      %28 = vector.load %arg6[%c0_11, %c0_12, %c0_13] : memref<8x64x128xf32, #tpu.memory_space<vmem>>, vector<8x64x128xf32>
      %cst_14 = arith.constant dense<0xFF800000> : vector<8x64xf32>
      %29 = vector.multi_reduction <maximumf>, %28, %cst_14 [2] : vector<8x64x128xf32> to vector<8x64xf32>
      %c0_15 = arith.constant 0 : index
      %c0_16 = arith.constant 0 : index
      %30 = vector.load %arg3[%c0_15, %c0_16] : memref<64x128xf32, #tpu.memory_space<vmem>>, vector<64x128xf32>
      %cst_17 = arith.constant dense<0.000000e+00> : vector<8x128xf32>
      %31 = tpu.matmul %29, %30, %cst_17 {dimension_numbers = #tpu.dot_dimension_numbers<[1], [0], [0], [1], [0, 0, 1, 1], [], []>} : vector<8x64xf32>, vector<64x128xf32>, vector<8x128xf32> -> vector<8x128xf32>
      %c0_18 = arith.constant 0 : index
      %c0_19 = arith.constant 0 : index
      %32 = vector.load %arg4[%c0_18, %c0_19] : memref<1x128xf32, #tpu.memory_space<vmem>>, vector<1x128xf32>
      %33 = vector.broadcast %32 : vector<1x128xf32> to vector<8x128xf32>
      %34 = arith.addf %31, %33 : vector<8x128xf32>
      %c0_20 = arith.constant 0 : index
      %c0_21 = arith.constant 0 : index
      %35 = vector.load %arg5[%c0_20, %c0_21] : memref<8x128xf32, #tpu.memory_space<vmem>>, vector<8x128xf32>
      tpu.vector_store %arg5[%c0_20, %c0_21], %34 {strides = array<i32>} : memref<8x128xf32, #tpu.memory_space<vmem>>, vector<8x128xf32>,
    } else {
    }
    return
  }
  func.func @transform_0(%arg0: i32, %arg1: i32) -> (i32, i32, i32) {
    %c0_i32 = arith.constant 0 : i32
    %c0_i32_0 = arith.constant 0 : i32
    return %arg0, %c0_i32, %arg1 : i32, i32, i32
  }
  func.func @transform_1(%arg0: i32, %arg1: i32) -> (i32, i32) {
    %c0_i32 = arith.constant 0 : i32
    %c0_i32_0 = arith.constant 0 : i32
    %c0_i32_1 = arith.constant 0 : i32
    return %c0_i32, %c0_i32_0 : i32, i32
  }
  func.func @transform_2(%arg0: i32, %arg1: i32) -> (i32, i32) {
    %c0_i32 = arith.constant 0 : i32
    %c0_i32_0 = arith.constant 0 : i32
    %c0_i32_1 = arith.constant 0 : i32
    return %c0_i32, %c0_i32_0 : i32, i32
  }
  func.func @transform_3(%arg0: i32, %arg1: i32) -> (i32, i32) {
    %c0_i32 = arith.constant 0 : i32
    %c0_i32_0 = arith.constant 0 : i32
    return %arg0, %c0_i32 : i32, i32
  }
}

</mosaic_0001>

<llo_original>
// kernel: tpu_custom_call.1
$region0: #{tpu_custom_call.1}
  #allocation0 [shape = 'u32[]', space=smem, size = 0x4, offset = 0x4, fixed_abs, tag = 'smem constant byte address 0x4 - core index']
  #allocation1 [shape = 'u32[72,128]{1,0:T(1,128)}', space=vmem, size = 0x9000, scoped, tag = 'internal scratch']
  #allocation2 [shape = 'f32[8,64,128]{2,1,0:T(8,128)}', space=vmem, size = 0x40000, scoped, tag = 'scratch operand']
  %s0 = inlined_call_operand.hbm [shape: bf16[16,64,1000], index: 0, kind: input, shape index: {}]
  %s1 = inlined_call_operand.hbm [shape: f32[64,128], index: 1, kind: input, shape index: {}]
  %s2 = inlined_call_operand.hbm [shape: f32[1,128], index: 2, kind: input, shape index: {}]
  %s3 = inlined_call_operand.hbm [shape: f32[16,128], index: 3, kind: output, shape index: {}]
  %s4 = sld [smem:[#allocation0]]
  $region65: #{tpu_custom_call.1} parent=0
    _
  %s6 = ssub.s32 1, %s4
  %s7 = scalar_select 0, %s6, %s4
  $region1: #{tpu_custom_call.1} parent=0
    #allocation3 [shape = 'u8[1048576]{0}', space=vmem, size = 0x100000, scoped, tag = 'input window, operand 0']
    #allocation4 [shape = 's32[2]{0}', space=sflag, size = 0x8, scoped, tag = 'scoped memory for tpu_custom_call.1']
    #allocation5 [shape = 's32[2]{0}', space=sflag, size = 0x8, scoped, tag = 'scoped memory for tpu_custom_call.1']
    #allocation6 [shape = 'u8[32768]{0}', space=vmem, size = 0x8000, scoped, tag = 'input window, operand 1, single buffered']
    #allocation7 [shape = 's32[1]{0}', space=sflag, size = 0x4, scoped, tag = 'scoped memory for tpu_custom_call.1']
    #allocation8 [shape = 'u8[512]{0}', space=vmem, size = 0x400, scoped, tag = 'input window, operand 2, single buffered']
    #allocation9 [shape = 'u8[8192]{0}', space=vmem, size = 0x2000, scoped, tag = 'output window, operand 0']
    %8 = vsyncpa [#allocation4], 0
    %s9 = scalar_lea.sflag [#allocation4], 1
    %10 = vsyncpa %s9, 0
    %11 = vsyncpa [#allocation7], 0
    %12 = vsyncpa [#allocation5], 0
    %s13 = scalar_lea.sflag [#allocation5], 1
    %14 = vsyncpa %s13, 0
    loop: start=0, step=1, limit=6
    $region2: #{tpu_custom_call.1} parent=1 // loop_pre_header
      _
    $region3: #{tpu_custom_call.1} parent=1 // loop_header
      %s16 = sphi 0, %s20
      %p17 = scmp.ge.s32.totalorder %s16, 6
      %s23 = sphi 0, %s35
      %s24 = sphi 0, %s31
      %s25 = sphi 0, %s23
      %s26 = sphi 0, %s24
      %s27 = sphi 0, %s25
      %s28 = sphi 0, %s26
      %s40 = sphi 0, %s42
      %s43 = sphi 0, %s40
      %s44 = sphi 0, %s43
      %s60 = sphi 0, %s44
      %s64 = sphi 0, %s64
      %s66 = sphi 0, %s64
      %s67 = sphi 0, %s66
      %s81 = sphi 0, %s67
      %s85 = sphi 0, %s85
      %s87 = sphi 0, %s85
      %s88 = sphi 0, %s87
      %s102 = sphi 0, %s88
      %s108 = sphi 0, %s110
      %s111 = sphi 0, %s108
      %s112 = sphi 0, %s111
      %s128 = sphi 0, %s112
    $region4: #{tpu_custom_call.1} parent=1 // loop_header_branch
      %19 = sbr.rel (%p17) target = $region8
    $region5: #{tpu_custom_call.1} parent=1 // loop_body
      %s21 = ssub.s32 %s16, 1
      %s22 = ssub.s32 %s16, 2
      %s29 = sadd.s32 1, %s24
      %p30 = scmp.ge.s32.totalorder %s29, 2
      %s31 = scalar_select %p30, 0, %s29
      %s32 = sadd.s32 1, %s23
      %s33 = scalar_select %p30, %s32, %s23
      %p34 = scmp.ge.s32.totalorder %s33, 2
      %s35 = scalar_select %p34, 0, %s33
      %s36 = ssub.s32 %s23, %s35
      %s37 = ssub.s32 %s24, %s31
      %s38 = sor.u32 %s36, %s37
      %p39 = scmp.eq.s32.totalorder %s38, 0
      %s41 = sadd.s32 %s40, 1
      %s42 = scalar_select %p39, %s40, %s41
      %p45 = pneg %p39
      %p46 = scmp.eq.s32.totalorder %s16, 3
      %p47 = por %p45, %p46
      %p48 = scmp.ne.s32.totalorder %s40, %s43
      %p49 = scmp.eq.s32.totalorder %s16, 0
      %p50 = por %p48, %p49
      %p51 = scmp.ne.s32.totalorder %s40, %s43
      %p52 = scmp.eq.s32.totalorder %s21, 3
      %p53 = por %p51, %p52
      %p54 = scmp.ne.s32.totalorder %s43, %s44
      %p55 = scmp.eq.s32.totalorder %s21, 0
      %p56 = por %p54, %p55
      %p57 = scmp.ne.s32.totalorder %s43, %s44
      %p58 = scmp.eq.s32.totalorder %s22, 3
      %p59 = por %p57, %p58
      %p61 = scmp.ne.s32.totalorder %s44, %s60
      %p62 = scmp.eq.s32.totalorder %s22, 0
      %p63 = por %p61, %p62
      %s65 = sadd.s32 %s64, 1
      %p68 = scmp.eq.s32.totalorder %s16, 3
      %p69 = scmp.ne.s32.totalorder %s64, %s66
      %p70 = scmp.eq.s32.totalorder %s16, 0
      %p71 = por %p69, %p70
      %p72 = scmp.ne.s32.totalorder %s64, %s66
      %p73 = scmp.eq.s32.totalorder %s21, 3
      %p74 = por %p72, %p73
      %p75 = scmp.ne.s32.totalorder %s66, %s67
      %p76 = scmp.eq.s32.totalorder %s21, 0
      %p77 = por %p75, %p76
      %p78 = scmp.ne.s32.totalorder %s66, %s67
      %p79 = scmp.eq.s32.totalorder %s22, 3
      %p80 = por %p78, %p79
      %p82 = scmp.ne.s32.totalorder %s67, %s81
      %p83 = scmp.eq.s32.totalorder %s22, 0
      %p84 = por %p82, %p83
      %s86 = sadd.s32 %s85, 1
      %p89 = scmp.eq.s32.totalorder %s16, 3
      %p90 = scmp.ne.s32.totalorder %s85, %s87
      %p91 = scmp.eq.s32.totalorder %s16, 0
      %p92 = por %p90, %p91
      %p93 = scmp.ne.s32.totalorder %s85, %s87
      %p94 = scmp.eq.s32.totalorder %s21, 3
      %p95 = por %p93, %p94
      %p96 = scmp.ne.s32.totalorder %s87, %s88
      %p97 = scmp.eq.s32.totalorder %s21, 0
      %p98 = por %p96, %p97
      %p99 = scmp.ne.s32.totalorder %s87, %s88
      %p100 = scmp.eq.s32.totalorder %s22, 3
      %p101 = por %p99, %p100
      %p103 = scmp.ne.s32.totalorder %s88, %s102
      %p104 = scmp.eq.s32.totalorder %s22, 0
      %p105 = por %p103, %p104
      %s106 = ssub.s32 %s23, %s35
      %p107 = scmp.eq.s32.totalorder %s106, 0
      %s109 = sadd.s32 %s108, 1
      %s110 = scalar_select %p107, %s108, %s109
      %p113 = pneg %p107
      %p114 = scmp.eq.s32.totalorder %s16, 3
      %p115 = por %p113, %p114
      %p116 = scmp.ne.s32.totalorder %s108, %s111
      %p117 = scmp.eq.s32.totalorder %s16, 0
      %p118 = por %p116, %p117
      %p119 = scmp.ne.s32.totalorder %s108, %s111
      %p120 = scmp.eq.s32.totalorder %s21, 3
      %p121 = por %p119, %p120
      %p122 = scmp.ne.s32.totalorder %s111, %s112
      %p123 = scmp.eq.s32.totalorder %s21, 0
      %p124 = por %p122, %p123
      %p125 = scmp.ne.s32.totalorder %s111, %s112
      %p126 = scmp.eq.s32.totalorder %s22, 3
      %p127 = por %p125, %p126
      %p129 = scmp.ne.s32.totalorder %s112, %s128
      %p130 = scmp.eq.s32.totalorder %s22, 0
      %p131 = por %p129, %p130
      %p132 = scmp.le.s32.totalorder 1, %s16
      %p133 = scmp.lt.s32.totalorder %s16, 5
      %p134 = pnand %p132, %p133
      %p135 = pneg %p134
      // Predicated region
      $region9: #{tpu_custom_call.1} parent=5 // pred_check
        _
      $region10: #{tpu_custom_call.1} parent=5 // pred_check_branch
        %137 = sbr.rel (%p134) target = $region12
      $region11: #{tpu_custom_call.1} parent=5 // pred_region
        %s138 = ssub.s32 %s16, 1
        // Predicated region
        $region13: #{tpu_custom_call.1} parent=11 // pred_check
          %p139 = pneg %p77
        $region14: #{tpu_custom_call.1} parent=11 // pred_check_branch
          %141 = sbr.rel (%p139) target = $region16
        $region15: #{tpu_custom_call.1} parent=11 // pred_region
          %143 = vsyncadd [#allocation7], 0
          %s144 = sshll.u32 %s1, 4
          %s145 = int_to_ptr.hbm [resolvable:$true] %s144
          %s146 = sshll.u32 [#allocation6], 4
          %s147 = int_to_ptr.vmem [resolvable:$true] %s146
          %152 = dma.hbm_to_vmem [thread:$0]  %s145, 1024, %s147, [#allocation7], 128, 128, 8
        $region16: #{tpu_custom_call.1} parent=11 // pred_fallthru
          _
        // Predicated region
        $region17: #{tpu_custom_call.1} parent=11 // pred_check
          %p153 = pneg %p98
        $region18: #{tpu_custom_call.1} parent=11 // pred_check_branch
          %155 = sbr.rel (%p153) target = $region20
        $region19: #{tpu_custom_call.1} parent=11 // pred_region
          %157 = vsyncadd [#allocation7], 0
          %s159 = sshll.u32 %s2, 4
          %s160 = int_to_ptr.hbm [resolvable:$true] %s159
          %s161 = sshll.u32 [#allocation8], 4
          %s162 = int_to_ptr.vmem [resolvable:$true] %s161
          %164 = dma.hbm_to_vmem [thread:$0]  %s160, 16, %s162, [#allocation7]
        $region20: #{tpu_custom_call.1} parent=11 // pred_fallthru
          _
      $region12: #{tpu_custom_call.1} parent=5 // pred_fallthru
        _
      %p165 = scmp.lt.s32.totalorder %s16, 4
      // Predicated region
      $region21: #{tpu_custom_call.1} parent=5 // pred_check
        %p166 = pneg %p165
      $region22: #{tpu_custom_call.1} parent=5 // pred_check_branch
        %168 = sbr.rel (%p166) target = $region24
      $region23: #{tpu_custom_call.1} parent=5 // pred_region
        // Predicated region
        $region25: #{tpu_custom_call.1} parent=23 // pred_check
          %p169 = pneg %p50
        $region26: #{tpu_custom_call.1} parent=23 // pred_check_branch
          %171 = sbr.rel (%p169) target = $region28
        $region27: #{tpu_custom_call.1} parent=23 // pred_region
          %s172 = sand.u32 %s40, 1
          %s173 = scalar_lea.sflag [#allocation4], %s172
          %s174 = sand.u32 %s40, 1
          %s175 = smul.addr %s174, 1024
          %s176 = scalar_lea.vmem [#allocation3], %s175
          %s177 = smul.u32 8, %s23
          %s178 = smul.u32 4, %s24
          %180 = vsyncadd %s173, 0
          %s181 = smul.addr %s177, 64
          %s182 = sadd.s32 %s178, %s181
          %s183 = smul.addr %s182, 4
          %s184 = scalar_lea.hbm %s0, %s183
          %s185 = sshll.u32 %s184, 4
          %s186 = int_to_ptr.hbm [resolvable:$true] %s185
          %s187 = sshll.u32 %s176, 4
          %s188 = int_to_ptr.vmem [resolvable:$true] %s187
          %193 = dma.hbm_to_vmem [thread:$0]  %s186, 16384, %s188, %s173, 512, 256, 16
        $region28: #{tpu_custom_call.1} parent=23 // pred_fallthru
          _
      $region24: #{tpu_custom_call.1} parent=5 // pred_fallthru
        _
      %p194 = scmp.le.s32.totalorder 1, %s16
      %p195 = scmp.lt.s32.totalorder %s16, 5
      %p196 = pnand %p194, %p195
      %p197 = pneg %p196
      // Predicated region
      $region29: #{tpu_custom_call.1} parent=5 // pred_check
        _
      $region30: #{tpu_custom_call.1} parent=5 // pred_check_branch
        %199 = sbr.rel (%p196) target = $region32
      $region31: #{tpu_custom_call.1} parent=5 // pred_region
        %s200 = ssub.s32 %s16, 1
        %s201 = sand.u32 %s43, 1
        %s202 = scalar_lea.sflag [#allocation4], %s201
        %s203 = sand.u32 %s43, 1
        %s204 = smul.addr %s203, 1024
        %s205 = scalar_lea.vmem [#allocation3], %s204
        // Predicated region
        $region33: #{tpu_custom_call.1} parent=31 // pred_check
          %p206 = pneg %p56
        $region34: #{tpu_custom_call.1} parent=31 // pred_check_branch
          %208 = sbr.rel (%p206) target = $region36
        $region35: #{tpu_custom_call.1} parent=31 // pred_region
          %210 = dma.done %s202, 16384
        $region36: #{tpu_custom_call.1} parent=31 // pred_fallthru
          _
        // Predicated region
        $region37: #{tpu_custom_call.1} parent=31 // pred_check
          %p211 = pneg %p77
        $region38: #{tpu_custom_call.1} parent=31 // pred_check_branch
          %213 = sbr.rel (%p211) target = $region40
        $region39: #{tpu_custom_call.1} parent=31 // pred_region
          %215 = dma.done [#allocation7], 1024
        $region40: #{tpu_custom_call.1} parent=31 // pred_fallthru
          _
        // Predicated region
        $region41: #{tpu_custom_call.1} parent=31 // pred_check
          %p216 = pneg %p98
        $region42: #{tpu_custom_call.1} parent=31 // pred_check_branch
          %218 = sbr.rel (%p216) target = $region44
        $region43: #{tpu_custom_call.1} parent=31 // pred_region
          %220 = dma.done [#allocation7], 16
        $region44: #{tpu_custom_call.1} parent=31 // pred_fallthru
          _
        %s221 = sand.u32 %s43, 1
        %s222 = scalar_lea.sflag [#allocation4], %s221
        %s223 = sand.u32 %s43, 1
        %s224 = smul.addr %s223, 1024
        %s225 = scalar_lea.vmem [#allocation3], %s224
        %p226 = pneg %p56
        %p227 = pneg %p53
        %p228 = pneg %p77
        %p229 = pneg %p74
        %p230 = pneg %p98
        %p231 = pneg %p95
        %p232 = pneg %p124
        %p233 = pneg %p121
        %s234 = sand.u32 %s111, 1
        %s235 = scalar_lea.sflag [#allocation5], %s234
        %s236 = sand.u32 %s111, 1
        %s237 = smul.addr %s236, 8
        %s238 = scalar_lea.vmem [#allocation9], %s237
        %s239 = smul.u32 8, %s25
        %s240 = smul.u32 4, %s26
        %p242 = scmp.eq.s32.totalorder %s26, 0
        // Predicated region
        $region45: #{tpu_custom_call.1} parent=31 // pred_check
          %p243 = pneg %p242
        $region46: #{tpu_custom_call.1} parent=31 // pred_check_branch
          %245 = sbr.rel (%p243) target = $region48
        $region47: #{tpu_custom_call.1} parent=31 // pred_region
          %246 = vst [vmem:[#allocation2] sm:$0xff] -inf
          %247 = vst [vmem:[#allocation2 + $0x8] sm:$0xff] -inf
          %248 = vst [vmem:[#allocation2 + $0x10] sm:$0xff] -inf
          %249 = vst [vmem:[#allocation2 + $0x18] sm:$0xff] -inf
          %250 = vst [vmem:[#allocation2 + $0x20] sm:$0xff] -inf
          %251 = vst [vmem:[#allocation2 + $0x28] sm:$0xff] -inf
          %252 = vst [vmem:[#allocation2 + $0x30] sm:$0xff] -inf
          %253 = vst [vmem:[#allocation2 + $0x38] sm:$0xff] -inf
          %254 = vst [vmem:[#allocation2 + $0x40] sm:$0xff] -inf
          %255 = vst [vmem:[#allocation2 + $0x48] sm:$0xff] -inf
          %256 = vst [vmem:[#allocation2 + $0x50] sm:$0xff] -inf
          %257 = vst [vmem:[#allocation2 + $0x58] sm:$0xff] -inf
          %258 = vst [vmem:[#allocation2 + $0x60] sm:$0xff] -inf
          %259 = vst [vmem:[#allocation2 + $0x68] sm:$0xff] -inf
          %260 = vst [vmem:[#allocation2 + $0x70] sm:$0xff] -inf
          %261 = vst [vmem:[#allocation2 + $0x78] sm:$0xff] -inf
          %262 = vst [vmem:[#allocation2 + $0x80] sm:$0xff] -inf
          %263 = vst [vmem:[#allocation2 + $0x88] sm:$0xff] -inf
          %264 = vst [vmem:[#allocation2 + $0x90] sm:$0xff] -inf
          %265 = vst [vmem:[#allocation2 + $0x98] sm:$0xff] -inf
          %266 = vst [vmem:[#allocation2 + $0xa0] sm:$0xff] -inf
          %267 = vst [vmem:[#allocation2 + $0xa8] sm:$0xff] -inf
          %268 = vst [vmem:[#allocation2 + $0xb0] sm:$0xff] -inf
          %269 = vst [vmem:[#allocation2 + $0xb8] sm:$0xff] -inf
          %270 = vst [vmem:[#allocation2 + $0xc0] sm:$0xff] -inf
          %271 = vst [vmem:[#allocation2 + $0xc8] sm:$0xff] -inf
          %272 = vst [vmem:[#allocation2 + $0xd0] sm:$0xff] -inf
          %273 = vst [vmem:[#allocation2 + $0xd8] sm:$0xff] -inf
          %274 = vst [vmem:[#allocation2 + $0xe0] sm:$0xff] -inf
          %275 = vst [vmem:[#allocation2 + $0xe8] sm:$0xff] -inf
          %276 = vst [vmem:[#allocation2 + $0xf0] sm:$0xff] -inf
          %277 = vst [vmem:[#allocation2 + $0xf8] sm:$0xff] -inf
          %278 = vst [vmem:[#allocation2 + $0x100] sm:$0xff] -inf
          %279 = vst [vmem:[#allocation2 + $0x108] sm:$0xff] -inf
          %280 = vst [vmem:[#allocation2 + $0x110] sm:$0xff] -inf
          %281 = vst [vmem:[#allocation2 + $0x118] sm:$0xff] -inf
          %282 = vst [vmem:[#allocation2 + $0x120] sm:$0xff] -inf
          %283 = vst [vmem:[#allocation2 + $0x128] sm:$0xff] -inf
          %284 = vst [vmem:[#allocation2 + $0x130] sm:$0xff] -inf
          %285 = vst [vmem:[#allocation2 + $0x138] sm:$0xff] -inf
          %286 = vst [vmem:[#allocation2 + $0x140] sm:$0xff] -inf
          %287 = vst [vmem:[#allocation2 + $0x148] sm:$0xff] -inf
          %288 = vst [vmem:[#allocation2 + $0x150] sm:$0xff] -inf
          %289 = vst [vmem:[#allocation2 + $0x158] sm:$0xff] -inf
          %290 = vst [vmem:[#allocation2 + $0x160] sm:$0xff] -inf
          %291 = vst [vmem:[#allocation2 + $0x168] sm:$0xff] -inf
          %292 = vst [vmem:[#allocation2 + $0x170] sm:$0xff] -inf
          %293 = vst [vmem:[#allocation2 + $0x178] sm:$0xff] -inf
          %294 = vst [vmem:[#allocation2 + $0x180] sm:$0xff] -inf
          %295 = vst [vmem:[#allocation2 + $0x188] sm:$0xff] -inf
          %296 = vst [vmem:[#allocation2 + $0x190] sm:$0xff] -inf
          %297 = vst [vmem:[#allocation2 + $0x198] sm:$0xff] -inf
          %298 = vst [vmem:[#allocation2 + $0x1a0] sm:$0xff] -inf
          %299 = vst [vmem:[#allocation2 + $0x1a8] sm:$0xff] -inf
          %300 = vst [vmem:[#allocation2 + $0x1b0] sm:$0xff] -inf
          %301 = vst [vmem:[#allocation2 + $0x1b8] sm:$0xff] -inf
          %302 = vst [vmem:[#allocation2 + $0x1c0] sm:$0xff] -inf
          %303 = vst [vmem:[#allocation2 + $0x1c8] sm:$0xff] -inf
          %304 = vst [vmem:[#allocation2 + $0x1d0] sm:$0xff] -inf
          %305 = vst [vmem:[#allocation2 + $0x1d8] sm:$0xff] -inf
          %306 = vst [vmem:[#allocation2 + $0x1e0] sm:$0xff] -inf
          %307 = vst [vmem:[#allocation2 + $0x1e8] sm:$0xff] -inf
          %308 = vst [vmem:[#allocation2 + $0x1f0] sm:$0xff] -inf
          %309 = vst [vmem:[#allocation2 + $0x1f8] sm:$0xff] -inf
        $region48: #{tpu_custom_call.1} parent=31 // pred_fallthru
          _
        %v310 = vld [vmem:[%s205] sm:$0xff]
        %v311 = vld [vmem:[%s205 + $0x8] sm:$0xff]
        %v312 = vld [vmem:[%s205 + $0x10] sm:$0xff]
        %v313 = vld [vmem:[%s205 + $0x18] sm:$0xff]
        %v314 = vld [vmem:[%s205 + $0x20] sm:$0xff]
        %v315 = vld [vmem:[%s205 + $0x28] sm:$0xff]
        %v316 = vld [vmem:[%s205 + $0x30] sm:$0xff]
        %v317 = vld [vmem:[%s205 + $0x38] sm:$0xff]
        %v318 = vld [vmem:[%s205 + $0x40] sm:$0xff]
        %v319 = vld [vmem:[%s205 + $0x48] sm:$0xff]
        %v320 = vld [vmem:[%s205 + $0x50] sm:$0xff]
        %v321 = vld [vmem:[%s205 + $0x58] sm:$0xff]
        %v322 = vld [vmem:[%s205 + $0x60] sm:$0xff]
        %v323 = vld [vmem:[%s205 + $0x68] sm:$0xff]
        %v324 = vld [vmem:[%s205 + $0x70] sm:$0xff]
        %v325 = vld [vmem:[%s205 + $0x78] sm:$0xff]
        %v326 = vld [vmem:[%s205 + $0x80] sm:$0xff]
        %v327 = vld [vmem:[%s205 + $0x88] sm:$0xff]
        %v328 = vld [vmem:[%s205 + $0x90] sm:$0xff]
        %v329 = vld [vmem:[%s205 + $0x98] sm:$0xff]
        %v330 = vld [vmem:[%s205 + $0xa0] sm:$0xff]
        %v331 = vld [vmem:[%s205 + $0xa8] sm:$0xff]
        %v332 = vld [vmem:[%s205 + $0xb0] sm:$0xff]
        %v333 = vld [vmem:[%s205 + $0xb8] sm:$0xff]
        %v334 = vld [vmem:[%s205 + $0xc0] sm:$0xff]
        %v335 = vld [vmem:[%s205 + $0xc8] sm:$0xff]
        %v336 = vld [vmem:[%s205 + $0xd0] sm:$0xff]
        %v337 = vld [vmem:[%s205 + $0xd8] sm:$0xff]
        %v338 = vld [vmem:[%s205 + $0xe0] sm:$0xff]
        %v339 = vld [vmem:[%s205 + $0xe8] sm:$0xff]
        %v340 = vld [vmem:[%s205 + $0xf0] sm:$0xff]
        %v341 = vld [vmem:[%s205 + $0xf8] sm:$0xff]
        %v342 = vld [vmem:[%s205 + $0x100] sm:$0xff]
        %v343 = vld [vmem:[%s205 + $0x108] sm:$0xff]
        %v344 = vld [vmem:[%s205 + $0x110] sm:$0xff]
        %v345 = vld [vmem:[%s205 + $0x118] sm:$0xff]
        %v346 = vld [vmem:[%s205 + $0x120] sm:$0xff]
        %v347 = vld [vmem:[%s205 + $0x128] sm:$0xff]
        %v348 = vld [vmem:[%s205 + $0x130] sm:$0xff]
        %v349 = vld [vmem:[%s205 + $0x138] sm:$0xff]
        %v350 = vld [vmem:[%s205 + $0x140] sm:$0xff]
        %v351 = vld [vmem:[%s205 + $0x148] sm:$0xff]
        %v352 = vld [vmem:[%s205 + $0x150] sm:$0xff]
        %v353 = vld [vmem:[%s205 + $0x158] sm:$0xff]
        %v354 = vld [vmem:[%s205 + $0x160] sm:$0xff]
        %v355 = vld [vmem:[%s205 + $0x168] sm:$0xff]
        %v356 = vld [vmem:[%s205 + $0x170] sm:$0xff]
        %v357 = vld [vmem:[%s205 + $0x178] sm:$0xff]
        %v358 = vld [vmem:[%s205 + $0x180] sm:$0xff]
        %v359 = vld [vmem:[%s205 + $0x188] sm:$0xff]
        %v360 = vld [vmem:[%s205 + $0x190] sm:$0xff]
        %v361 = vld [vmem:[%s205 + $0x198] sm:$0xff]
        %v362 = vld [vmem:[%s205 + $0x1a0] sm:$0xff]
        %v363 = vld [vmem:[%s205 + $0x1a8] sm:$0xff]
        %v364 = vld [vmem:[%s205 + $0x1b0] sm:$0xff]
        %v365 = vld [vmem:[%s205 + $0x1b8] sm:$0xff]
        %v366 = vld [vmem:[%s205 + $0x1c0] sm:$0xff]
        %v367 = vld [vmem:[%s205 + $0x1c8] sm:$0xff]
        %v368 = vld [vmem:[%s205 + $0x1d0] sm:$0xff]
        %v369 = vld [vmem:[%s205 + $0x1d8] sm:$0xff]
        %v370 = vld [vmem:[%s205 + $0x1e0] sm:$0xff]
        %v371 = vld [vmem:[%s205 + $0x1e8] sm:$0xff]
        %v372 = vld [vmem:[%s205 + $0x1f0] sm:$0xff]
        %v373 = vld [vmem:[%s205 + $0x1f8] sm:$0xff]
        %v374 = vld [vmem:[%s205 + $0x200] sm:$0xff]
        %v375 = vld [vmem:[%s205 + $0x208] sm:$0xff]
        %v376 = vld [vmem:[%s205 + $0x210] sm:$0xff]
        %v377 = vld [vmem:[%s205 + $0x218] sm:$0xff]
        %v378 = vld [vmem:[%s205 + $0x220] sm:$0xff]
        %v379 = vld [vmem:[%s205 + $0x228] sm:$0xff]
        %v380 = vld [vmem:[%s205 + $0x230] sm:$0xff]
        %v381 = vld [vmem:[%s205 + $0x238] sm:$0xff]
        %v382 = vld [vmem:[%s205 + $0x240] sm:$0xff]
        %v383 = vld [vmem:[%s205 + $0x248] sm:$0xff]
        %v384 = vld [vmem:[%s205 + $0x250] sm:$0xff]
        %v385 = vld [vmem:[%s205 + $0x258] sm:$0xff]
        %v386 = vld [vmem:[%s205 + $0x260] sm:$0xff]
        %v387 = vld [vmem:[%s205 + $0x268] sm:$0xff]
        %v388 = vld [vmem:[%s205 + $0x270] sm:$0xff]
        %v389 = vld [vmem:[%s205 + $0x278] sm:$0xff]
        %v390 = vld [vmem:[%s205 + $0x280] sm:$0xff]
        %v391 = vld [vmem:[%s205 + $0x288] sm:$0xff]
        %v392 = vld [vmem:[%s205 + $0x290] sm:$0xff]
        %v393 = vld [vmem:[%s205 + $0x298] sm:$0xff]
        %v394 = vld [vmem:[%s205 + $0x2a0] sm:$0xff]
        %v395 = vld [vmem:[%s205 + $0x2a8] sm:$0xff]
        %v396 = vld [vmem:[%s205 + $0x2b0] sm:$0xff]
        %v397 = vld [vmem:[%s205 + $0x2b8] sm:$0xff]
        %v398 = vld [vmem:[%s205 + $0x2c0] sm:$0xff]
        %v399 = vld [vmem:[%s205 + $0x2c8] sm:$0xff]
        %v400 = vld [vmem:[%s205 + $0x2d0] sm:$0xff]
        %v401 = vld [vmem:[%s205 + $0x2d8] sm:$0xff]
        %v402 = vld [vmem:[%s205 + $0x2e0] sm:$0xff]
        %v403 = vld [vmem:[%s205 + $0x2e8] sm:$0xff]
        %v404 = vld [vmem:[%s205 + $0x2f0] sm:$0xff]
        %v405 = vld [vmem:[%s205 + $0x2f8] sm:$0xff]
        %v406 = vld [vmem:[%s205 + $0x300] sm:$0xff]
        %v407 = vld [vmem:[%s205 + $0x308] sm:$0xff]
        %v408 = vld [vmem:[%s205 + $0x310] sm:$0xff]
        %v409 = vld [vmem:[%s205 + $0x318] sm:$0xff]
        %v410 = vld [vmem:[%s205 + $0x320] sm:$0xff]
        %v411 = vld [vmem:[%s205 + $0x328] sm:$0xff]
        %v412 = vld [vmem:[%s205 + $0x330] sm:$0xff]
        %v413 = vld [vmem:[%s205 + $0x338] sm:$0xff]
        %v414 = vld [vmem:[%s205 + $0x340] sm:$0xff]
        %v415 = vld [vmem:[%s205 + $0x348] sm:$0xff]
        %v416 = vld [vmem:[%s205 + $0x350] sm:$0xff]
        %v417 = vld [vmem:[%s205 + $0x358] sm:$0xff]
        %v418 = vld [vmem:[%s205 + $0x360] sm:$0xff]
        %v419 = vld [vmem:[%s205 + $0x368] sm:$0xff]
        %v420 = vld [vmem:[%s205 + $0x370] sm:$0xff]
        %v421 = vld [vmem:[%s205 + $0x378] sm:$0xff]
        %v422 = vld [vmem:[%s205 + $0x380] sm:$0xff]
        %v423 = vld [vmem:[%s205 + $0x388] sm:$0xff]
        %v424 = vld [vmem:[%s205 + $0x390] sm:$0xff]
        %v425 = vld [vmem:[%s205 + $0x398] sm:$0xff]
        %v426 = vld [vmem:[%s205 + $0x3a0] sm:$0xff]
        %v427 = vld [vmem:[%s205 + $0x3a8] sm:$0xff]
        %v428 = vld [vmem:[%s205 + $0x3b0] sm:$0xff]
        %v429 = vld [vmem:[%s205 + $0x3b8] sm:$0xff]
        %v430 = vld [vmem:[%s205 + $0x3c0] sm:$0xff]
        %v431 = vld [vmem:[%s205 + $0x3c8] sm:$0xff]
        %v432 = vld [vmem:[%s205 + $0x3d0] sm:$0xff]
        %v433 = vld [vmem:[%s205 + $0x3d8] sm:$0xff]
        %v434 = vld [vmem:[%s205 + $0x3e0] sm:$0xff]
        %v435 = vld [vmem:[%s205 + $0x3e8] sm:$0xff]
        %v436 = vld [vmem:[%s205 + $0x3f0] sm:$0xff]
        %v437 = vld [vmem:[%s205 + $0x3f8] sm:$0xff]
        %v438 = vlaneseq
        %v439 = vand.u32 %v438, 127
        %v440 = vadd.s32 %v439, 128
        %v441 = vadd.s32 %v439, 256
        %v442 = vadd.s32 %v439, 384
        %p443 = scmp.eq.s32.totalorder %s26, 1
        %s444 = scalar_select %p443, 488, 512
        %v445 = vstv %s444
        %vm446 = vcmp.lt.s32.totalorder %v439, %v445
        %vm447 = vcmp.lt.s32.totalorder %v440, %v445
        %vm448 = vcmp.lt.s32.totalorder %v441, %v445
        %vm449 = vcmp.lt.s32.totalorder %v442, %v445
        %vm450 = vmpackc.low %vm447, %vm446
        %vm451 = vmpackc.low %vm449, %vm448
        %v452 = vsel %vm450, %v310, 4286644096
        %v453 = vsel %vm451, %v311, 4286644096
        %v454 = vsel %vm450, %v312, 4286644096
        %v455 = vsel %vm451, %v313, 4286644096
        %v456 = vsel %vm450, %v314, 4286644096
        %v457 = vsel %vm451, %v315, 4286644096
        %v458 = vsel %vm450, %v316, 4286644096
        %v459 = vsel %vm451, %v317, 4286644096
        %v460 = vsel %vm450, %v318, 4286644096
        %v461 = vsel %vm451, %v319, 4286644096
        %v462 = vsel %vm450, %v320, 4286644096
        %v463 = vsel %vm451, %v321, 4286644096
        %v464 = vsel %vm450, %v322, 4286644096
        %v465 = vsel %vm451, %v323, 4286644096
        %v466 = vsel %vm450, %v324, 4286644096
        %v467 = vsel %vm451, %v325, 4286644096
        %v468 = vsel %vm450, %v326, 4286644096
        %v469 = vsel %vm451, %v327, 4286644096
        %v470 = vsel %vm450, %v328, 4286644096
        %v471 = vsel %vm451, %v329, 4286644096
        %v472 = vsel %vm450, %v330, 4286644096
        %v473 = vsel %vm451, %v331, 4286644096
        %v474 = vsel %vm450, %v332, 4286644096
        %v475 = vsel %vm451, %v333, 4286644096
        %v476 = vsel %vm450, %v334, 4286644096
        %v477 = vsel %vm451, %v335, 4286644096
        %v478 = vsel %vm450, %v336, 4286644096
        %v479 = vsel %vm451, %v337, 4286644096
        %v480 = vsel %vm450, %v338, 4286644096
        %v481 = vsel %vm451, %v339, 4286644096
        %v482 = vsel %vm450, %v340, 4286644096
        %v483 = vsel %vm451, %v341, 4286644096
        %v484 = vsel %vm450, %v342, 4286644096
        %v485 = vsel %vm451, %v343, 4286644096
        %v486 = vsel %vm450, %v344, 4286644096
        %v487 = vsel %vm451, %v345, 4286644096
        %v488 = vsel %vm450, %v346, 4286644096
        %v489 = vsel %vm451, %v347, 4286644096
        %v490 = vsel %vm450, %v348, 4286644096
        %v491 = vsel %vm451, %v349, 4286644096
        %v492 = vsel %vm450, %v350, 4286644096
        %v493 = vsel %vm451, %v351, 4286644096
        %v494 = vsel %vm450, %v352, 4286644096
        %v495 = vsel %vm451, %v353, 4286644096
        %v496 = vsel %vm450, %v354, 4286644096
        %v497 = vsel %vm451, %v355, 4286644096
        %v498 = vsel %vm450, %v356, 4286644096
        %v499 = vsel %vm451, %v357, 4286644096
        %v500 = vsel %vm450, %v358, 4286644096
        %v501 = vsel %vm451, %v359, 4286644096
        %v502 = vsel %vm450, %v360, 4286644096
        %v503 = vsel %vm451, %v361, 4286644096
        %v504 = vsel %vm450, %v362, 4286644096
        %v505 = vsel %vm451, %v363, 4286644096
        %v506 = vsel %vm450, %v364, 4286644096
        %v507 = vsel %vm451, %v365, 4286644096
        %v508 = vsel %vm450, %v366, 4286644096
        %v509 = vsel %vm451, %v367, 4286644096
        %v510 = vsel %vm450, %v368, 4286644096
        %v511 = vsel %vm451, %v369, 4286644096
        %v512 = vsel %vm450, %v370, 4286644096
        %v513 = vsel %vm451, %v371, 4286644096
        %v514 = vsel %vm450, %v372, 4286644096
        %v515 = vsel %vm451, %v373, 4286644096
        %v516 = vsel %vm450, %v374, 4286644096
        %v517 = vsel %vm451, %v375, 4286644096
        %v518 = vsel %vm450, %v376, 4286644096
        %v519 = vsel %vm451, %v377, 4286644096
        %v520 = vsel %vm450, %v378, 4286644096
        %v521 = vsel %vm451, %v379, 4286644096
        %v522 = vsel %vm450, %v380, 4286644096
        %v523 = vsel %vm451, %v381, 4286644096
        %v524 = vsel %vm450, %v382, 4286644096
        %v525 = vsel %vm451, %v383, 4286644096
        %v526 = vsel %vm450, %v384, 4286644096
        %v527 = vsel %vm451, %v385, 4286644096
        %v528 = vsel %vm450, %v386, 4286644096
        %v529 = vsel %vm451, %v387, 4286644096
        %v530 = vsel %vm450, %v388, 4286644096
        %v531 = vsel %vm451, %v389, 4286644096
        %v532 = vsel %vm450, %v390, 4286644096
        %v533 = vsel %vm451, %v391, 4286644096
        %v534 = vsel %vm450, %v392, 4286644096
        %v535 = vsel %vm451, %v393, 4286644096
        %v536 = vsel %vm450, %v394, 4286644096
        %v537 = vsel %vm451, %v395, 4286644096
        %v538 = vsel %vm450, %v396, 4286644096
        %v539 = vsel %vm451, %v397, 4286644096
        %v540 = vsel %vm450, %v398, 4286644096
        %v541 = vsel %vm451, %v399, 4286644096
        %v542 = vsel %vm450, %v400, 4286644096
        %v543 = vsel %vm451, %v401, 4286644096
        %v544 = vsel %vm450, %v402, 4286644096
        %v545 = vsel %vm451, %v403, 4286644096
        %v546 = vsel %vm450, %v404, 4286644096
        %v547 = vsel %vm451, %v405, 4286644096
        %v548 = vsel %vm450, %v406, 4286644096
        %v549 = vsel %vm451, %v407, 4286644096
        %v550 = vsel %vm450, %v408, 4286644096
        %v551 = vsel %vm451, %v409, 4286644096
        %v552 = vsel %vm450, %v410, 4286644096
        %v553 = vsel %vm451, %v411, 4286644096
        %v554 = vsel %vm450, %v412, 4286644096
        %v555 = vsel %vm451, %v413, 4286644096
        %v556 = vsel %vm450, %v414, 4286644096
        %v557 = vsel %vm451, %v415, 4286644096
        %v558 = vsel %vm450, %v416, 4286644096
        %v559 = vsel %vm451, %v417, 4286644096
        %v560 = vsel %vm450, %v418, 4286644096
        %v561 = vsel %vm451, %v419, 4286644096
        %v562 = vsel %vm450, %v420, 4286644096
        %v563 = vsel %vm451, %v421, 4286644096
        %v564 = vsel %vm450, %v422, 4286644096
        %v565 = vsel %vm451, %v423, 4286644096
        %v566 = vsel %vm450, %v424, 4286644096
        %v567 = vsel %vm451, %v425, 4286644096
        %v568 = vsel %vm450, %v426, 4286644096
        %v569 = vsel %vm451, %v427, 4286644096
        %v570 = vsel %vm450, %v428, 4286644096
        %v571 = vsel %vm451, %v429, 4286644096
        %v572 = vsel %vm450, %v430, 4286644096
        %v573 = vsel %vm451, %v431, 4286644096
        %v574 = vsel %vm450, %v432, 4286644096
        %v575 = vsel %vm451, %v433, 4286644096
        %v576 = vsel %vm450, %v434, 4286644096
        %v577 = vsel %vm451, %v435, 4286644096
        %v578 = vsel %vm450, %v436, 4286644096
        %v579 = vsel %vm451, %v437, 4286644096
        %v580 = vld [vmem:[#allocation2] sm:$0xff]
        %v581 = vld [vmem:[#allocation2 + $0x8] sm:$0xff]
        %v582 = vld [vmem:[#allocation2 + $0x10] sm:$0xff]
        %v583 = vld [vmem:[#allocation2 + $0x18] sm:$0xff]
        %v584 = vld [vmem:[#allocation2 + $0x20] sm:$0xff]
        %v585 = vld [vmem:[#allocation2 + $0x28] sm:$0xff]
        %v586 = vld [vmem:[#allocation2 + $0x30] sm:$0xff]
        %v587 = vld [vmem:[#allocation2 + $0x38] sm:$0xff]
        %v588 = vld [vmem:[#allocation2 + $0x40] sm:$0xff]
        %v589 = vld [vmem:[#allocation2 + $0x48] sm:$0xff]
        %v590 = vld [vmem:[#allocation2 + $0x50] sm:$0xff]
        %v591 = vld [vmem:[#allocation2 + $0x58] sm:$0xff]
        %v592 = vld [vmem:[#allocation2 + $0x60] sm:$0xff]
        %v593 = vld [vmem:[#allocation2 + $0x68] sm:$0xff]
        %v594 = vld [vmem:[#allocation2 + $0x70] sm:$0xff]
        %v595 = vld [vmem:[#allocation2 + $0x78] sm:$0xff]
        %v596 = vld [vmem:[#allocation2 + $0x80] sm:$0xff]
        %v597 = vld [vmem:[#allocation2 + $0x88] sm:$0xff]
        %v598 = vld [vmem:[#allocation2 + $0x90] sm:$0xff]
        %v599 = vld [vmem:[#allocation2 + $0x98] sm:$0xff]
        %v600 = vld [vmem:[#allocation2 + $0xa0] sm:$0xff]
        %v601 = vld [vmem:[#allocation2 + $0xa8] sm:$0xff]
        %v602 = vld [vmem:[#allocation2 + $0xb0] sm:$0xff]
        %v603 = vld [vmem:[#allocation2 + $0xb8] sm:$0xff]
        %v604 = vld [vmem:[#allocation2 + $0xc0] sm:$0xff]
        %v605 = vld [vmem:[#allocation2 + $0xc8] sm:$0xff]
        %v606 = vld [vmem:[#allocation2 + $0xd0] sm:$0xff]
        %v607 = vld [vmem:[#allocation2 + $0xd8] sm:$0xff]
        %v608 = vld [vmem:[#allocation2 + $0xe0] sm:$0xff]
        %v609 = vld [vmem:[#allocation2 + $0xe8] sm:$0xff]
        %v610 = vld [vmem:[#allocation2 + $0xf0] sm:$0xff]
        %v611 = vld [vmem:[#allocation2 + $0xf8] sm:$0xff]
        %v612 = vld [vmem:[#allocation2 + $0x100] sm:$0xff]
        %v613 = vld [vmem:[#allocation2 + $0x108] sm:$0xff]
        %v614 = vld [vmem:[#allocation2 + $0x110] sm:$0xff]
        %v615 = vld [vmem:[#allocation2 + $0x118] sm:$0xff]
        %v616 = vld [vmem:[#allocation2 + $0x120] sm:$0xff]
        %v617 = vld [vmem:[#allocation2 + $0x128] sm:$0xff]
        %v618 = vld [vmem:[#allocation2 + $0x130] sm:$0xff]
        %v619 = vld [vmem:[#allocation2 + $0x138] sm:$0xff]
        %v620 = vld [vmem:[#allocation2 + $0x140] sm:$0xff]
        %v621 = vld [vmem:[#allocation2 + $0x148] sm:$0xff]
        %v622 = vld [vmem:[#allocation2 + $0x150] sm:$0xff]
        %v623 = vld [vmem:[#allocation2 + $0x158] sm:$0xff]
        %v624 = vld [vmem:[#allocation2 + $0x160] sm:$0xff]
        %v625 = vld [vmem:[#allocation2 + $0x168] sm:$0xff]
        %v626 = vld [vmem:[#allocation2 + $0x170] sm:$0xff]
        %v627 = vld [vmem:[#allocation2 + $0x178] sm:$0xff]
        %v628 = vld [vmem:[#allocation2 + $0x180] sm:$0xff]
        %v629 = vld [vmem:[#allocation2 + $0x188] sm:$0xff]
        %v630 = vld [vmem:[#allocation2 + $0x190] sm:$0xff]
        %v631 = vld [vmem:[#allocation2 + $0x198] sm:$0xff]
        %v632 = vld [vmem:[#allocation2 + $0x1a0] sm:$0xff]
        %v633 = vld [vmem:[#allocation2 + $0x1a8] sm:$0xff]
        %v634 = vld [vmem:[#allocation2 + $0x1b0] sm:$0xff]
        %v635 = vld [vmem:[#allocation2 + $0x1b8] sm:$0xff]
        %v636 = vld [vmem:[#allocation2 + $0x1c0] sm:$0xff]
        %v637 = vld [vmem:[#allocation2 + $0x1c8] sm:$0xff]
        %v638 = vld [vmem:[#allocation2 + $0x1d0] sm:$0xff]
        %v639 = vld [vmem:[#allocation2 + $0x1d8] sm:$0xff]
        %v640 = vld [vmem:[#allocation2 + $0x1e0] sm:$0xff]
        %v641 = vld [vmem:[#allocation2 + $0x1e8] sm:$0xff]
        %v642 = vld [vmem:[#allocation2 + $0x1f0] sm:$0xff]
        %v643 = vld [vmem:[#allocation2 + $0x1f8] sm:$0xff]
        %v644 = vunpack.c.l.bf16 %v452
        %v645 = vunpack.c.l.bf16 %v454
        %v646 = vunpack.c.l.bf16 %v456
        %v647 = vunpack.c.l.bf16 %v458
        %v648 = vunpack.c.l.bf16 %v460
        %v649 = vunpack.c.l.bf16 %v462
        %v650 = vunpack.c.l.bf16 %v464
        %v651 = vunpack.c.l.bf16 %v466
        %v652 = vunpack.c.l.bf16 %v468
        %v653 = vunpack.c.l.bf16 %v470
        %v654 = vunpack.c.l.bf16 %v472
        %v655 = vunpack.c.l.bf16 %v474
        %v656 = vunpack.c.l.bf16 %v476
        %v657 = vunpack.c.l.bf16 %v478
        %v658 = vunpack.c.l.bf16 %v480
        %v659 = vunpack.c.l.bf16 %v482
        %v660 = vunpack.c.l.bf16 %v484
        %v661 = vunpack.c.l.bf16 %v486
        %v662 = vunpack.c.l.bf16 %v488
        %v663 = vunpack.c.l.bf16 %v490
        %v664 = vunpack.c.l.bf16 %v492
        %v665 = vunpack.c.l.bf16 %v494
        %v666 = vunpack.c.l.bf16 %v496
        %v667 = vunpack.c.l.bf16 %v498
        %v668 = vunpack.c.l.bf16 %v500
        %v669 = vunpack.c.l.bf16 %v502
        %v670 = vunpack.c.l.bf16 %v504
        %v671 = vunpack.c.l.bf16 %v506
        %v672 = vunpack.c.l.bf16 %v508
        %v673 = vunpack.c.l.bf16 %v510
        %v674 = vunpack.c.l.bf16 %v512
        %v675 = vunpack.c.l.bf16 %v514
        %v676 = vunpack.c.l.bf16 %v516
        %v677 = vunpack.c.l.bf16 %v518
        %v678 = vunpack.c.l.bf16 %v520
        %v679 = vunpack.c.l.bf16 %v522
        %v680 = vunpack.c.l.bf16 %v524
        %v681 = vunpack.c.l.bf16 %v526
        %v682 = vunpack.c.l.bf16 %v528
        %v683 = vunpack.c.l.bf16 %v530
        %v684 = vunpack.c.l.bf16 %v532
        %v685 = vunpack.c.l.bf16 %v534
        %v686 = vunpack.c.l.bf16 %v536
        %v687 = vunpack.c.l.bf16 %v538
        %v688 = vunpack.c.l.bf16 %v540
        %v689 = vunpack.c.l.bf16 %v542
        %v690 = vunpack.c.l.bf16 %v544
        %v691 = vunpack.c.l.bf16 %v546
        %v692 = vunpack.c.l.bf16 %v548
        %v693 = vunpack.c.l.bf16 %v550
        %v694 = vunpack.c.l.bf16 %v552
        %v695 = vunpack.c.l.bf16 %v554
        %v696 = vunpack.c.l.bf16 %v556
        %v697 = vunpack.c.l.bf16 %v558
        %v698 = vunpack.c.l.bf16 %v560
        %v699 = vunpack.c.l.bf16 %v562
        %v700 = vunpack.c.l.bf16 %v564
        %v701 = vunpack.c.l.bf16 %v566
        %v702 = vunpack.c.l.bf16 %v568
        %v703 = vunpack.c.l.bf16 %v570
        %v704 = vunpack.c.l.bf16 %v572
        %v705 = vunpack.c.l.bf16 %v574
        %v706 = vunpack.c.l.bf16 %v576
        %v707 = vunpack.c.l.bf16 %v578
        %v708 = vmax.f32 %v580, %v644
        %v709 = vmax.f32 %v581, %v645
        %v710 = vmax.f32 %v582, %v646
        %v711 = vmax.f32 %v583, %v647
        %v712 = vmax.f32 %v584, %v648
        %v713 = vmax.f32 %v585, %v649
        %v714 = vmax.f32 %v586, %v650
        %v715 = vmax.f32 %v587, %v651
        %v716 = vmax.f32 %v588, %v652
        %v717 = vmax.f32 %v589, %v653
        %v718 = vmax.f32 %v590, %v654
        %v719 = vmax.f32 %v591, %v655
        %v720 = vmax.f32 %v592, %v656
        %v721 = vmax.f32 %v593, %v657
        %v722 = vmax.f32 %v594, %v658
        %v723 = vmax.f32 %v595, %v659
        %v724 = vmax.f32 %v596, %v660
        %v725 = vmax.f32 %v597, %v661
        %v726 = vmax.f32 %v598, %v662
        %v727 = vmax.f32 %v599, %v663
        %v728 = vmax.f32 %v600, %v664
        %v729 = vmax.f32 %v601, %v665
        %v730 = vmax.f32 %v602, %v666
        %v731 = vmax.f32 %v603, %v667
        %v732 = vmax.f32 %v604, %v668
        %v733 = vmax.f32 %v605, %v669
        %v734 = vmax.f32 %v606, %v670
        %v735 = vmax.f32 %v607, %v671
        %v736 = vmax.f32 %v608, %v672
        %v737 = vmax.f32 %v609, %v673
        %v738 = vmax.f32 %v610, %v674
        %v739 = vmax.f32 %v611, %v675
        %v740 = vmax.f32 %v612, %v676
        %v741 = vmax.f32 %v613, %v677
        %v742 = vmax.f32 %v614, %v678
        %v743 = vmax.f32 %v615, %v679
        %v744 = vmax.f32 %v616, %v680
        %v745 = vmax.f32 %v617, %v681
        %v746 = vmax.f32 %v618, %v682
        %v747 = vmax.f32 %v619, %v683
        %v748 = vmax.f32 %v620, %v684
        %v749 = vmax.f32 %v621, %v685
        %v750 = vmax.f32 %v622, %v686
        %v751 = vmax.f32 %v623, %v687
        %v752 = vmax.f32 %v624, %v688
        %v753 = vmax.f32 %v625, %v689
        %v754 = vmax.f32 %v626, %v690
        %v755 = vmax.f32 %v627, %v691
        %v756 = vmax.f32 %v628, %v692
        %v757 = vmax.f32 %v629, %v693
        %v758 = vmax.f32 %v630, %v694
        %v759 = vmax.f32 %v631, %v695
        %v760 = vmax.f32 %v632, %v696
        %v761 = vmax.f32 %v633, %v697
        %v762 = vmax.f32 %v634, %v698
        %v763 = vmax.f32 %v635, %v699
        %v764 = vmax.f32 %v636, %v700
        %v765 = vmax.f32 %v637, %v701
        %v766 = vmax.f32 %v638, %v702
        %v767 = vmax.f32 %v639, %v703
        %v768 = vmax.f32 %v640, %v704
        %v769 = vmax.f32 %v641, %v705
        %v770 = vmax.f32 %v642, %v706
        %v771 = vmax.f32 %v643, %v707
        %v836 = vrot.slane %v452, 4
        %v837 = vrot.slane %v454, 4
        %v838 = vrot.slane %v456, 4
        %v839 = vrot.slane %v458, 4
        %v840 = vrot.slane %v460, 4
        %v841 = vrot.slane %v462, 4
        %v842 = vrot.slane %v464, 4
        %v843 = vrot.slane %v466, 4
        %v844 = vrot.slane %v468, 4
        %v845 = vrot.slane %v470, 4
        %v846 = vrot.slane %v472, 4
        %v847 = vrot.slane %v474, 4
        %v848 = vrot.slane %v476, 4
        %v849 = vrot.slane %v478, 4
        %v850 = vrot.slane %v480, 4
        %v851 = vrot.slane %v482, 4
        %v852 = vrot.slane %v484, 4
        %v853 = vrot.slane %v486, 4
        %v854 = vrot.slane %v488, 4
        %v855 = vrot.slane %v490, 4
        %v856 = vrot.slane %v492, 4
        %v857 = vrot.slane %v494, 4
        %v858 = vrot.slane %v496, 4
        %v859 = vrot.slane %v498, 4
        %v860 = vrot.slane %v500, 4
        %v861 = vrot.slane %v502, 4
        %v862 = vrot.slane %v504, 4
        %v863 = vrot.slane %v506, 4
        %v864 = vrot.slane %v508, 4
        %v865 = vrot.slane %v510, 4
        %v866 = vrot.slane %v512, 4
        %v867 = vrot.slane %v514, 4
        %v868 = vrot.slane %v516, 4
        %v869 = vrot.slane %v518, 4
        %v870 = vrot.slane %v520, 4
        %v871 = vrot.slane %v522, 4
        %v872 = vrot.slane %v524, 4
        %v873 = vrot.slane %v526, 4
        %v874 = vrot.slane %v528, 4
        %v875 = vrot.slane %v530, 4
        %v876 = vrot.slane %v532, 4
        %v877 = vrot.slane %v534, 4
        %v878 = vrot.slane %v536, 4
        %v879 = vrot.slane %v538, 4
        %v880 = vrot.slane %v540, 4
        %v881 = vrot.slane %v542, 4
        %v882 = vrot.slane %v544, 4
        %v883 = vrot.slane %v546, 4
        %v884 = vrot.slane %v548, 4
        %v885 = vrot.slane %v550, 4
        %v886 = vrot.slane %v552, 4
        %v887 = vrot.slane %v554, 4
        %v888 = vrot.slane %v556, 4
        %v889 = vrot.slane %v558, 4
        %v890 = vrot.slane %v560, 4
        %v891 = vrot.slane %v562, 4
        %v892 = vrot.slane %v564, 4
        %v893 = vrot.slane %v566, 4
        %v894 = vrot.slane %v568, 4
        %v895 = vrot.slane %v570, 4
        %v896 = vrot.slane %v572, 4
        %v897 = vrot.slane %v574, 4
        %v898 = vrot.slane %v576, 4
        %v899 = vrot.slane %v578, 4
        %v964 = vunpack.c.l.bf16 %v836
        %v965 = vunpack.c.l.bf16 %v837
        %v966 = vunpack.c.l.bf16 %v838
        %v967 = vunpack.c.l.bf16 %v839
        %v968 = vunpack.c.l.bf16 %v840
        %v969 = vunpack.c.l.bf16 %v841
        %v970 = vunpack.c.l.bf16 %v842
        %v971 = vunpack.c.l.bf16 %v843
        %v972 = vunpack.c.l.bf16 %v844
        %v973 = vunpack.c.l.bf16 %v845
        %v974 = vunpack.c.l.bf16 %v846
        %v975 = vunpack.c.l.bf16 %v847
        %v976 = vunpack.c.l.bf16 %v848
        %v977 = vunpack.c.l.bf16 %v849
        %v978 = vunpack.c.l.bf16 %v850
        %v979 = vunpack.c.l.bf16 %v851
        %v980 = vunpack.c.l.bf16 %v852
        %v981 = vunpack.c.l.bf16 %v853
        %v982 = vunpack.c.l.bf16 %v854
        %v983 = vunpack.c.l.bf16 %v855
        %v984 = vunpack.c.l.bf16 %v856
        %v985 = vunpack.c.l.bf16 %v857
        %v986 = vunpack.c.l.bf16 %v858
        %v987 = vunpack.c.l.bf16 %v859
        %v988 = vunpack.c.l.bf16 %v860
        %v989 = vunpack.c.l.bf16 %v861
        %v990 = vunpack.c.l.bf16 %v862
        %v991 = vunpack.c.l.bf16 %v863
        %v992 = vunpack.c.l.bf16 %v864
        %v993 = vunpack.c.l.bf16 %v865
        %v994 = vunpack.c.l.bf16 %v866
        %v995 = vunpack.c.l.bf16 %v867
        %v996 = vunpack.c.l.bf16 %v868
        %v997 = vunpack.c.l.bf16 %v869
        %v998 = vunpack.c.l.bf16 %v870
        %v999 = vunpack.c.l.bf16 %v871
        %v1000 = vunpack.c.l.bf16 %v872
        %v1001 = vunpack.c.l.bf16 %v873
        %v1002 = vunpack.c.l.bf16 %v874
        %v1003 = vunpack.c.l.bf16 %v875
        %v1004 = vunpack.c.l.bf16 %v876
        %v1005 = vunpack.c.l.bf16 %v877
        %v1006 = vunpack.c.l.bf16 %v878
        %v1007 = vunpack.c.l.bf16 %v879
        %v1008 = vunpack.c.l.bf16 %v880
        %v1009 = vunpack.c.l.bf16 %v881
        %v1010 = vunpack.c.l.bf16 %v882
        %v1011 = vunpack.c.l.bf16 %v883
        %v1012 = vunpack.c.l.bf16 %v884
        %v1013 = vunpack.c.l.bf16 %v885
        %v1014 = vunpack.c.l.bf16 %v886
        %v1015 = vunpack.c.l.bf16 %v887
        %v1016 = vunpack.c.l.bf16 %v888
        %v1017 = vunpack.c.l.bf16 %v889
        %v1018 = vunpack.c.l.bf16 %v890
        %v1019 = vunpack.c.l.bf16 %v891
        %v1020 = vunpack.c.l.bf16 %v892
        %v1021 = vunpack.c.l.bf16 %v893
        %v1022 = vunpack.c.l.bf16 %v894
        %v1023 = vunpack.c.l.bf16 %v895
        %v1024 = vunpack.c.l.bf16 %v896
        %v1025 = vunpack.c.l.bf16 %v897
        %v1026 = vunpack.c.l.bf16 %v898
        %v1027 = vunpack.c.l.bf16 %v899
        %v1028 = vmax.f32 %v708, %v964
        %v1029 = vmax.f32 %v709, %v965
        %v1030 = vmax.f32 %v710, %v966
        %v1031 = vmax.f32 %v711, %v967
        %v1032 = vmax.f32 %v712, %v968
        %v1033 = vmax.f32 %v713, %v969
        %v1034 = vmax.f32 %v714, %v970
        %v1035 = vmax.f32 %v715, %v971
        %v1036 = vmax.f32 %v716, %v972
        %v1037 = vmax.f32 %v717, %v973
        %v1038 = vmax.f32 %v718, %v974
        %v1039 = vmax.f32 %v719, %v975
        %v1040 = vmax.f32 %v720, %v976
        %v1041 = vmax.f32 %v721, %v977
        %v1042 = vmax.f32 %v722, %v978
        %v1043 = vmax.f32 %v723, %v979
        %v1044 = vmax.f32 %v724, %v980
        %v1045 = vmax.f32 %v725, %v981
        %v1046 = vmax.f32 %v726, %v982
        %v1047 = vmax.f32 %v727, %v983
        %v1048 = vmax.f32 %v728, %v984
        %v1049 = vmax.f32 %v729, %v985
        %v1050 = vmax.f32 %v730, %v986
        %v1051 = vmax.f32 %v731, %v987
        %v1052 = vmax.f32 %v732, %v988
        %v1053 = vmax.f32 %v733, %v989
        %v1054 = vmax.f32 %v734, %v990
        %v1055 = vmax.f32 %v735, %v991
        %v1056 = vmax.f32 %v736, %v992
        %v1057 = vmax.f32 %v737, %v993
        %v1058 = vmax.f32 %v738, %v994
        %v1059 = vmax.f32 %v739, %v995
        %v1060 = vmax.f32 %v740, %v996
        %v1061 = vmax.f32 %v741, %v997
        %v1062 = vmax.f32 %v742, %v998
        %v1063 = vmax.f32 %v743, %v999
        %v1064 = vmax.f32 %v744, %v1000
        %v1065 = vmax.f32 %v745, %v1001
        %v1066 = vmax.f32 %v746, %v1002
        %v1067 = vmax.f32 %v747, %v1003
        %v1068 = vmax.f32 %v748, %v1004
        %v1069 = vmax.f32 %v749, %v1005
        %v1070 = vmax.f32 %v750, %v1006
        %v1071 = vmax.f32 %v751, %v1007
        %v1072 = vmax.f32 %v752, %v1008
        %v1073 = vmax.f32 %v753, %v1009
        %v1074 = vmax.f32 %v754, %v1010
        %v1075 = vmax.f32 %v755, %v1011
        %v1076 = vmax.f32 %v756, %v1012
        %v1077 = vmax.f32 %v757, %v1013
        %v1078 = vmax.f32 %v758, %v1014
        %v1079 = vmax.f32 %v759, %v1015
        %v1080 = vmax.f32 %v760, %v1016
        %v1081 = vmax.f32 %v761, %v1017
        %v1082 = vmax.f32 %v762, %v1018
        %v1083 = vmax.f32 %v763, %v1019
        %v1084 = vmax.f32 %v764, %v1020
        %v1085 = vmax.f32 %v765, %v1021
        %v1086 = vmax.f32 %v766, %v1022
        %v1087 = vmax.f32 %v767, %v1023
        %v1088 = vmax.f32 %v768, %v1024
        %v1089 = vmax.f32 %v769, %v1025
        %v1090 = vmax.f32 %v770, %v1026
        %v1091 = vmax.f32 %v771, %v1027
        %v1092 = vunpack.c.l.bf16 %v453
        %v1093 = vunpack.c.l.bf16 %v455
        %v1094 = vunpack.c.l.bf16 %v457
        %v1095 = vunpack.c.l.bf16 %v459
        %v1096 = vunpack.c.l.bf16 %v461
        %v1097 = vunpack.c.l.bf16 %v463
        %v1098 = vunpack.c.l.bf16 %v465
        %v1099 = vunpack.c.l.bf16 %v467
        %v1100 = vunpack.c.l.bf16 %v469
        %v1101 = vunpack.c.l.bf16 %v471
        %v1102 = vunpack.c.l.bf16 %v473
        %v1103 = vunpack.c.l.bf16 %v475
        %v1104 = vunpack.c.l.bf16 %v477
        %v1105 = vunpack.c.l.bf16 %v479
        %v1106 = vunpack.c.l.bf16 %v481
        %v1107 = vunpack.c.l.bf16 %v483
        %v1108 = vunpack.c.l.bf16 %v485
        %v1109 = vunpack.c.l.bf16 %v487
        %v1110 = vunpack.c.l.bf16 %v489
        %v1111 = vunpack.c.l.bf16 %v491
        %v1112 = vunpack.c.l.bf16 %v493
        %v1113 = vunpack.c.l.bf16 %v495
        %v1114 = vunpack.c.l.bf16 %v497
        %v1115 = vunpack.c.l.bf16 %v499
        %v1116 = vunpack.c.l.bf16 %v501
        %v1117 = vunpack.c.l.bf16 %v503
        %v1118 = vunpack.c.l.bf16 %v505
        %v1119 = vunpack.c.l.bf16 %v507
        %v1120 = vunpack.c.l.bf16 %v509
        %v1121 = vunpack.c.l.bf16 %v511
        %v1122 = vunpack.c.l.bf16 %v513
        %v1123 = vunpack.c.l.bf16 %v515
        %v1124 = vunpack.c.l.bf16 %v517
        %v1125 = vunpack.c.l.bf16 %v519
        %v1126 = vunpack.c.l.bf16 %v521
        %v1127 = vunpack.c.l.bf16 %v523
        %v1128 = vunpack.c.l.bf16 %v525
        %v1129 = vunpack.c.l.bf16 %v527
        %v1130 = vunpack.c.l.bf16 %v529
        %v1131 = vunpack.c.l.bf16 %v531
        %v1132 = vunpack.c.l.bf16 %v533
        %v1133 = vunpack.c.l.bf16 %v535
        %v1134 = vunpack.c.l.bf16 %v537
        %v1135 = vunpack.c.l.bf16 %v539
        %v1136 = vunpack.c.l.bf16 %v541
        %v1137 = vunpack.c.l.bf16 %v543
        %v1138 = vunpack.c.l.bf16 %v545
        %v1139 = vunpack.c.l.bf16 %v547
        %v1140 = vunpack.c.l.bf16 %v549
        %v1141 = vunpack.c.l.bf16 %v551
        %v1142 = vunpack.c.l.bf16 %v553
        %v1143 = vunpack.c.l.bf16 %v555
        %v1144 = vunpack.c.l.bf16 %v557
        %v1145 = vunpack.c.l.bf16 %v559
        %v1146 = vunpack.c.l.bf16 %v561
        %v1147 = vunpack.c.l.bf16 %v563
        %v1148 = vunpack.c.l.bf16 %v565
        %v1149 = vunpack.c.l.bf16 %v567
        %v1150 = vunpack.c.l.bf16 %v569
        %v1151 = vunpack.c.l.bf16 %v571
        %v1152 = vunpack.c.l.bf16 %v573
        %v1153 = vunpack.c.l.bf16 %v575
        %v1154 = vunpack.c.l.bf16 %v577
        %v1155 = vunpack.c.l.bf16 %v579
        %v1156 = vmax.f32 %v1028, %v1092
        %v1157 = vmax.f32 %v1029, %v1093
        %v1158 = vmax.f32 %v1030, %v1094
        %v1159 = vmax.f32 %v1031, %v1095
        %v1160 = vmax.f32 %v1032, %v1096
        %v1161 = vmax.f32 %v1033, %v1097
        %v1162 = vmax.f32 %v1034, %v1098
        %v1163 = vmax.f32 %v1035, %v1099
        %v1164 = vmax.f32 %v1036, %v1100
        %v1165 = vmax.f32 %v1037, %v1101
        %v1166 = vmax.f32 %v1038, %v1102
        %v1167 = vmax.f32 %v1039, %v1103
        %v1168 = vmax.f32 %v1040, %v1104
        %v1169 = vmax.f32 %v1041, %v1105
        %v1170 = vmax.f32 %v1042, %v1106
        %v1171 = vmax.f32 %v1043, %v1107
        %v1172 = vmax.f32 %v1044, %v1108
        %v1173 = vmax.f32 %v1045, %v1109
        %v1174 = vmax.f32 %v1046, %v1110
        %v1175 = vmax.f32 %v1047, %v1111
        %v1176 = vmax.f32 %v1048, %v1112
        %v1177 = vmax.f32 %v1049, %v1113
        %v1178 = vmax.f32 %v1050, %v1114
        %v1179 = vmax.f32 %v1051, %v1115
        %v1180 = vmax.f32 %v1052, %v1116
        %v1181 = vmax.f32 %v1053, %v1117
        %v1182 = vmax.f32 %v1054, %v1118
        %v1183 = vmax.f32 %v1055, %v1119
        %v1184 = vmax.f32 %v1056, %v1120
        %v1185 = vmax.f32 %v1057, %v1121
        %v1186 = vmax.f32 %v1058, %v1122
        %v1187 = vmax.f32 %v1059, %v1123
        %v1188 = vmax.f32 %v1060, %v1124
        %v1189 = vmax.f32 %v1061, %v1125
        %v1190 = vmax.f32 %v1062, %v1126
        %v1191 = vmax.f32 %v1063, %v1127
        %v1192 = vmax.f32 %v1064, %v1128
        %v1193 = vmax.f32 %v1065, %v1129
        %v1194 = vmax.f32 %v1066, %v1130
        %v1195 = vmax.f32 %v1067, %v1131
        %v1196 = vmax.f32 %v1068, %v1132
        %v1197 = vmax.f32 %v1069, %v1133
        %v1198 = vmax.f32 %v1070, %v1134
        %v1199 = vmax.f32 %v1071, %v1135
        %v1200 = vmax.f32 %v1072, %v1136
        %v1201 = vmax.f32 %v1073, %v1137
        %v1202 = vmax.f32 %v1074, %v1138
        %v1203 = vmax.f32 %v1075, %v1139
        %v1204 = vmax.f32 %v1076, %v1140
        %v1205 = vmax.f32 %v1077, %v1141
        %v1206 = vmax.f32 %v1078, %v1142
        %v1207 = vmax.f32 %v1079, %v1143
        %v1208 = vmax.f32 %v1080, %v1144
        %v1209 = vmax.f32 %v1081, %v1145
        %v1210 = vmax.f32 %v1082, %v1146
        %v1211 = vmax.f32 %v1083, %v1147
        %v1212 = vmax.f32 %v1084, %v1148
        %v1213 = vmax.f32 %v1085, %v1149
        %v1214 = vmax.f32 %v1086, %v1150
        %v1215 = vmax.f32 %v1087, %v1151
        %v1216 = vmax.f32 %v1088, %v1152
        %v1217 = vmax.f32 %v1089, %v1153
        %v1218 = vmax.f32 %v1090, %v1154
        %v1219 = vmax.f32 %v1091, %v1155
        %v1284 = vrot.slane %v453, 4
        %v1285 = vrot.slane %v455, 4
        %v1286 = vrot.slane %v457, 4
        %v1287 = vrot.slane %v459, 4
        %v1288 = vrot.slane %v461, 4
        %v1289 = vrot.slane %v463, 4
        %v1290 = vrot.slane %v465, 4
        %v1291 = vrot.slane %v467, 4
        %v1292 = vrot.slane %v469, 4
        %v1293 = vrot.slane %v471, 4
        %v1294 = vrot.slane %v473, 4
        %v1295 = vrot.slane %v475, 4
        %v1296 = vrot.slane %v477, 4
        %v1297 = vrot.slane %v479, 4
        %v1298 = vrot.slane %v481, 4
        %v1299 = vrot.slane %v483, 4
        %v1300 = vrot.slane %v485, 4
        %v1301 = vrot.slane %v487, 4
        %v1302 = vrot.slane %v489, 4
        %v1303 = vrot.slane %v491, 4
        %v1304 = vrot.slane %v493, 4
        %v1305 = vrot.slane %v495, 4
        %v1306 = vrot.slane %v497, 4
        %v1307 = vrot.slane %v499, 4
        %v1308 = vrot.slane %v501, 4
        %v1309 = vrot.slane %v503, 4
        %v1310 = vrot.slane %v505, 4
        %v1311 = vrot.slane %v507, 4
        %v1312 = vrot.slane %v509, 4
        %v1313 = vrot.slane %v511, 4
        %v1314 = vrot.slane %v513, 4
        %v1315 = vrot.slane %v515, 4
        %v1316 = vrot.slane %v517, 4
        %v1317 = vrot.slane %v519, 4
        %v1318 = vrot.slane %v521, 4
        %v1319 = vrot.slane %v523, 4
        %v1320 = vrot.slane %v525, 4
        %v1321 = vrot.slane %v527, 4
        %v1322 = vrot.slane %v529, 4
        %v1323 = vrot.slane %v531, 4
        %v1324 = vrot.slane %v533, 4
        %v1325 = vrot.slane %v535, 4
        %v1326 = vrot.slane %v537, 4
        %v1327 = vrot.slane %v539, 4
        %v1328 = vrot.slane %v541, 4
        %v1329 = vrot.slane %v543, 4
        %v1330 = vrot.slane %v545, 4
        %v1331 = vrot.slane %v547, 4
        %v1332 = vrot.slane %v549, 4
        %v1333 = vrot.slane %v551, 4
        %v1334 = vrot.slane %v553, 4
        %v1335 = vrot.slane %v555, 4
        %v1336 = vrot.slane %v557, 4
        %v1337 = vrot.slane %v559, 4
        %v1338 = vrot.slane %v561, 4
        %v1339 = vrot.slane %v563, 4
        %v1340 = vrot.slane %v565, 4
        %v1341 = vrot.slane %v567, 4
        %v1342 = vrot.slane %v569, 4
        %v1343 = vrot.slane %v571, 4
        %v1344 = vrot.slane %v573, 4
        %v1345 = vrot.slane %v575, 4
        %v1346 = vrot.slane %v577, 4
        %v1347 = vrot.slane %v579, 4
        %v1412 = vunpack.c.l.bf16 %v1284
        %v1413 = vunpack.c.l.bf16 %v1285
        %v1414 = vunpack.c.l.bf16 %v1286
        %v1415 = vunpack.c.l.bf16 %v1287
        %v1416 = vunpack.c.l.bf16 %v1288
        %v1417 = vunpack.c.l.bf16 %v1289
        %v1418 = vunpack.c.l.bf16 %v1290
        %v1419 = vunpack.c.l.bf16 %v1291
        %v1420 = vunpack.c.l.bf16 %v1292
        %v1421 = vunpack.c.l.bf16 %v1293
        %v1422 = vunpack.c.l.bf16 %v1294
        %v1423 = vunpack.c.l.bf16 %v1295
        %v1424 = vunpack.c.l.bf16 %v1296
        %v1425 = vunpack.c.l.bf16 %v1297
        %v1426 = vunpack.c.l.bf16 %v1298
        %v1427 = vunpack.c.l.bf16 %v1299
        %v1428 = vunpack.c.l.bf16 %v1300
        %v1429 = vunpack.c.l.bf16 %v1301
        %v1430 = vunpack.c.l.bf16 %v1302
        %v1431 = vunpack.c.l.bf16 %v1303
        %v1432 = vunpack.c.l.bf16 %v1304
        %v1433 = vunpack.c.l.bf16 %v1305
        %v1434 = vunpack.c.l.bf16 %v1306
        %v1435 = vunpack.c.l.bf16 %v1307
        %v1436 = vunpack.c.l.bf16 %v1308
        %v1437 = vunpack.c.l.bf16 %v1309
        %v1438 = vunpack.c.l.bf16 %v1310
        %v1439 = vunpack.c.l.bf16 %v1311
        %v1440 = vunpack.c.l.bf16 %v1312
        %v1441 = vunpack.c.l.bf16 %v1313
        %v1442 = vunpack.c.l.bf16 %v1314
        %v1443 = vunpack.c.l.bf16 %v1315
        %v1444 = vunpack.c.l.bf16 %v1316
        %v1445 = vunpack.c.l.bf16 %v1317
        %v1446 = vunpack.c.l.bf16 %v1318
        %v1447 = vunpack.c.l.bf16 %v1319
        %v1448 = vunpack.c.l.bf16 %v1320
        %v1449 = vunpack.c.l.bf16 %v1321
        %v1450 = vunpack.c.l.bf16 %v1322
        %v1451 = vunpack.c.l.bf16 %v1323
        %v1452 = vunpack.c.l.bf16 %v1324
        %v1453 = vunpack.c.l.bf16 %v1325
        %v1454 = vunpack.c.l.bf16 %v1326
        %v1455 = vunpack.c.l.bf16 %v1327
        %v1456 = vunpack.c.l.bf16 %v1328
        %v1457 = vunpack.c.l.bf16 %v1329
        %v1458 = vunpack.c.l.bf16 %v1330
        %v1459 = vunpack.c.l.bf16 %v1331
        %v1460 = vunpack.c.l.bf16 %v1332
        %v1461 = vunpack.c.l.bf16 %v1333
        %v1462 = vunpack.c.l.bf16 %v1334
        %v1463 = vunpack.c.l.bf16 %v1335
        %v1464 = vunpack.c.l.bf16 %v1336
        %v1465 = vunpack.c.l.bf16 %v1337
        %v1466 = vunpack.c.l.bf16 %v1338
        %v1467 = vunpack.c.l.bf16 %v1339
        %v1468 = vunpack.c.l.bf16 %v1340
        %v1469 = vunpack.c.l.bf16 %v1341
        %v1470 = vunpack.c.l.bf16 %v1342
        %v1471 = vunpack.c.l.bf16 %v1343
        %v1472 = vunpack.c.l.bf16 %v1344
        %v1473 = vunpack.c.l.bf16 %v1345
        %v1474 = vunpack.c.l.bf16 %v1346
        %v1475 = vunpack.c.l.bf16 %v1347
        %v1476 = vmax.f32 %v1156, %v1412
        %v1477 = vmax.f32 %v1157, %v1413
        %v1478 = vmax.f32 %v1158, %v1414
        %v1479 = vmax.f32 %v1159, %v1415
        %v1480 = vmax.f32 %v1160, %v1416
        %v1481 = vmax.f32 %v1161, %v1417
        %v1482 = vmax.f32 %v1162, %v1418
        %v1483 = vmax.f32 %v1163, %v1419
        %v1484 = vmax.f32 %v1164, %v1420
        %v1485 = vmax.f32 %v1165, %v1421
        %v1486 = vmax.f32 %v1166, %v1422
        %v1487 = vmax.f32 %v1167, %v1423
        %v1488 = vmax.f32 %v1168, %v1424
        %v1489 = vmax.f32 %v1169, %v1425
        %v1490 = vmax.f32 %v1170, %v1426
        %v1491 = vmax.f32 %v1171, %v1427
        %v1492 = vmax.f32 %v1172, %v1428
        %v1493 = vmax.f32 %v1173, %v1429
        %v1494 = vmax.f32 %v1174, %v1430
        %v1495 = vmax.f32 %v1175, %v1431
        %v1496 = vmax.f32 %v1176, %v1432
        %v1497 = vmax.f32 %v1177, %v1433
        %v1498 = vmax.f32 %v1178, %v1434
        %v1499 = vmax.f32 %v1179, %v1435
        %v1500 = vmax.f32 %v1180, %v1436
        %v1501 = vmax.f32 %v1181, %v1437
        %v1502 = vmax.f32 %v1182, %v1438
        %v1503 = vmax.f32 %v1183, %v1439
        %v1504 = vmax.f32 %v1184, %v1440
        %v1505 = vmax.f32 %v1185, %v1441
        %v1506 = vmax.f32 %v1186, %v1442
        %v1507 = vmax.f32 %v1187, %v1443
        %v1508 = vmax.f32 %v1188, %v1444
        %v1509 = vmax.f32 %v1189, %v1445
        %v1510 = vmax.f32 %v1190, %v1446
        %v1511 = vmax.f32 %v1191, %v1447
        %v1512 = vmax.f32 %v1192, %v1448
        %v1513 = vmax.f32 %v1193, %v1449
        %v1514 = vmax.f32 %v1194, %v1450
        %v1515 = vmax.f32 %v1195, %v1451
        %v1516 = vmax.f32 %v1196, %v1452
        %v1517 = vmax.f32 %v1197, %v1453
        %v1518 = vmax.f32 %v1198, %v1454
        %v1519 = vmax.f32 %v1199, %v1455
        %v1520 = vmax.f32 %v1200, %v1456
        %v1521 = vmax.f32 %v1201, %v1457
        %v1522 = vmax.f32 %v1202, %v1458
        %v1523 = vmax.f32 %v1203, %v1459
        %v1524 = vmax.f32 %v1204, %v1460
        %v1525 = vmax.f32 %v1205, %v1461
        %v1526 = vmax.f32 %v1206, %v1462
        %v1527 = vmax.f32 %v1207, %v1463
        %v1528 = vmax.f32 %v1208, %v1464
        %v1529 = vmax.f32 %v1209, %v1465
        %v1530 = vmax.f32 %v1210, %v1466
        %v1531 = vmax.f32 %v1211, %v1467
        %v1532 = vmax.f32 %v1212, %v1468
        %v1533 = vmax.f32 %v1213, %v1469
        %v1534 = vmax.f32 %v1214, %v1470
        %v1535 = vmax.f32 %v1215, %v1471
        %v1536 = vmax.f32 %v1216, %v1472
        %v1537 = vmax.f32 %v1217, %v1473
        %v1538 = vmax.f32 %v1218, %v1474
        %v1539 = vmax.f32 %v1219, %v1475
        %1540 = vst [vmem:[#allocation2] sm:$0xff] %v1476
        %1541 = vst [vmem:[#allocation2 + $0x8] sm:$0xff] %v1477
        %1542 = vst [vmem:[#allocation2 + $0x10] sm:$0xff] %v1478
        %1543 = vst [vmem:[#allocation2 + $0x18] sm:$0xff] %v1479
        %1544 = vst [vmem:[#allocation2 + $0x20] sm:$0xff] %v1480
        %1545 = vst [vmem:[#allocation2 + $0x28] sm:$0xff] %v1481
        %1546 = vst [vmem:[#allocation2 + $0x30] sm:$0xff] %v1482
        %1547 = vst [vmem:[#allocation2 + $0x38] sm:$0xff] %v1483
        %1548 = vst [vmem:[#allocation2 + $0x40] sm:$0xff] %v1484
        %1549 = vst [vmem:[#allocation2 + $0x48] sm:$0xff] %v1485
        %1550 = vst [vmem:[#allocation2 + $0x50] sm:$0xff] %v1486
        %1551 = vst [vmem:[#allocation2 + $0x58] sm:$0xff] %v1487
        %1552 = vst [vmem:[#allocation2 + $0x60] sm:$0xff] %v1488
        %1553 = vst [vmem:[#allocation2 + $0x68] sm:$0xff] %v1489
        %1554 = vst [vmem:[#allocation2 + $0x70] sm:$0xff] %v1490
        %1555 = vst [vmem:[#allocation2 + $0x78] sm:$0xff] %v1491
        %1556 = vst [vmem:[#allocation2 + $0x80] sm:$0xff] %v1492
        %1557 = vst [vmem:[#allocation2 + $0x88] sm:$0xff] %v1493
        %1558 = vst [vmem:[#allocation2 + $0x90] sm:$0xff] %v1494
        %1559 = vst [vmem:[#allocation2 + $0x98] sm:$0xff] %v1495
        %1560 = vst [vmem:[#allocation2 + $0xa0] sm:$0xff] %v1496
        %1561 = vst [vmem:[#allocation2 + $0xa8] sm:$0xff] %v1497
        %1562 = vst [vmem:[#allocation2 + $0xb0] sm:$0xff] %v1498
        %1563 = vst [vmem:[#allocation2 + $0xb8] sm:$0xff] %v1499
        %1564 = vst [vmem:[#allocation2 + $0xc0] sm:$0xff] %v1500
        %1565 = vst [vmem:[#allocation2 + $0xc8] sm:$0xff] %v1501
        %1566 = vst [vmem:[#allocation2 + $0xd0] sm:$0xff] %v1502
        %1567 = vst [vmem:[#allocation2 + $0xd8] sm:$0xff] %v1503
        %1568 = vst [vmem:[#allocation2 + $0xe0] sm:$0xff] %v1504
        %1569 = vst [vmem:[#allocation2 + $0xe8] sm:$0xff] %v1505
        %1570 = vst [vmem:[#allocation2 + $0xf0] sm:$0xff] %v1506
        %1571 = vst [vmem:[#allocation2 + $0xf8] sm:$0xff] %v1507
        %1572 = vst [vmem:[#allocation2 + $0x100] sm:$0xff] %v1508
        %1573 = vst [vmem:[#allocation2 + $0x108] sm:$0xff] %v1509
        %1574 = vst [vmem:[#allocation2 + $0x110] sm:$0xff] %v1510
        %1575 = vst [vmem:[#allocation2 + $0x118] sm:$0xff] %v1511
        %1576 = vst [vmem:[#allocation2 + $0x120] sm:$0xff] %v1512
        %1577 = vst [vmem:[#allocation2 + $0x128] sm:$0xff] %v1513
        %1578 = vst [vmem:[#allocation2 + $0x130] sm:$0xff] %v1514
        %1579 = vst [vmem:[#allocation2 + $0x138] sm:$0xff] %v1515
        %1580 = vst [vmem:[#allocation2 + $0x140] sm:$0xff] %v1516
        %1581 = vst [vmem:[#allocation2 + $0x148] sm:$0xff] %v1517
        %1582 = vst [vmem:[#allocation2 + $0x150] sm:$0xff] %v1518
        %1583 = vst [vmem:[#allocation2 + $0x158] sm:$0xff] %v1519
        %1584 = vst [vmem:[#allocation2 + $0x160] sm:$0xff] %v1520
        %1585 = vst [vmem:[#allocation2 + $0x168] sm:$0xff] %v1521
        %1586 = vst [vmem:[#allocation2 + $0x170] sm:$0xff] %v1522
        %1587 = vst [vmem:[#allocation2 + $0x178] sm:$0xff] %v1523
        %1588 = vst [vmem:[#allocation2 + $0x180] sm:$0xff] %v1524
        %1589 = vst [vmem:[#allocation2 + $0x188] sm:$0xff] %v1525
        %1590 = vst [vmem:[#allocation2 + $0x190] sm:$0xff] %v1526
        %1591 = vst [vmem:[#allocation2 + $0x198] sm:$0xff] %v1527
        %1592 = vst [vmem:[#allocation2 + $0x1a0] sm:$0xff] %v1528
        %1593 = vst [vmem:[#allocation2 + $0x1a8] sm:$0xff] %v1529
        %1594 = vst [vmem:[#allocation2 + $0x1b0] sm:$0xff] %v1530
        %1595 = vst [vmem:[#allocation2 + $0x1b8] sm:$0xff] %v1531
        %1596 = vst [vmem:[#allocation2 + $0x1c0] sm:$0xff] %v1532
        %1597 = vst [vmem:[#allocation2 + $0x1c8] sm:$0xff] %v1533
        %1598 = vst [vmem:[#allocation2 + $0x1d0] sm:$0xff] %v1534
        %1599 = vst [vmem:[#allocation2 + $0x1d8] sm:$0xff] %v1535
        %1600 = vst [vmem:[#allocation2 + $0x1e0] sm:$0xff] %v1536
        %1601 = vst [vmem:[#allocation2 + $0x1e8] sm:$0xff] %v1537
        %1602 = vst [vmem:[#allocation2 + $0x1f0] sm:$0xff] %v1538
        %1603 = vst [vmem:[#allocation2 + $0x1f8] sm:$0xff] %v1539
        // Predicated region
        $region49: #{tpu_custom_call.1} parent=31 // pred_check
          %p1604 = pneg %p443
        $region50: #{tpu_custom_call.1} parent=31 // pred_check_branch
          %1606 = sbr.rel (%p1604) target = $region52
        $region51: #{tpu_custom_call.1} parent=31 // pred_region
          %v1607 = vld [vmem:[#allocation2] sm:$0xff]
          %v1608 = vld [vmem:[#allocation2 + $0x8] sm:$0xff]
          %v1609 = vld [vmem:[#allocation2 + $0x10] sm:$0xff]
          %v1610 = vld [vmem:[#allocation2 + $0x18] sm:$0xff]
          %v1611 = vld [vmem:[#allocation2 + $0x20] sm:$0xff]
          %v1612 = vld [vmem:[#allocation2 + $0x28] sm:$0xff]
          %v1613 = vld [vmem:[#allocation2 + $0x30] sm:$0xff]
          %v1614 = vld [vmem:[#allocation2 + $0x38] sm:$0xff]
          %v1615 = vld [vmem:[#allocation2 + $0x40] sm:$0xff]
          %v1616 = vld [vmem:[#allocation2 + $0x48] sm:$0xff]
          %v1617 = vld [vmem:[#allocation2 + $0x50] sm:$0xff]
          %v1618 = vld [vmem:[#allocation2 + $0x58] sm:$0xff]
          %v1619 = vld [vmem:[#allocation2 + $0x60] sm:$0xff]
          %v1620 = vld [vmem:[#allocation2 + $0x68] sm:$0xff]
          %v1621 = vld [vmem:[#allocation2 + $0x70] sm:$0xff]
          %v1622 = vld [vmem:[#allocation2 + $0x78] sm:$0xff]
          %v1623 = vld [vmem:[#allocation2 + $0x80] sm:$0xff]
          %v1624 = vld [vmem:[#allocation2 + $0x88] sm:$0xff]
          %v1625 = vld [vmem:[#allocation2 + $0x90] sm:$0xff]
          %v1626 = vld [vmem:[#allocation2 + $0x98] sm:$0xff]
          %v1627 = vld [vmem:[#allocation2 + $0xa0] sm:$0xff]
          %v1628 = vld [vmem:[#allocation2 + $0xa8] sm:$0xff]
          %v1629 = vld [vmem:[#allocation2 + $0xb0] sm:$0xff]
          %v1630 = vld [vmem:[#allocation2 + $0xb8] sm:$0xff]
          %v1631 = vld [vmem:[#allocation2 + $0xc0] sm:$0xff]
          %v1632 = vld [vmem:[#allocation2 + $0xc8] sm:$0xff]
          %v1633 = vld [vmem:[#allocation2 + $0xd0] sm:$0xff]
          %v1634 = vld [vmem:[#allocation2 + $0xd8] sm:$0xff]
          %v1635 = vld [vmem:[#allocation2 + $0xe0] sm:$0xff]
          %v1636 = vld [vmem:[#allocation2 + $0xe8] sm:$0xff]
          %v1637 = vld [vmem:[#allocation2 + $0xf0] sm:$0xff]
          %v1638 = vld [vmem:[#allocation2 + $0xf8] sm:$0xff]
          %v1639 = vld [vmem:[#allocation2 + $0x100] sm:$0xff]
          %v1640 = vld [vmem:[#allocation2 + $0x108] sm:$0xff]
          %v1641 = vld [vmem:[#allocation2 + $0x110] sm:$0xff]
          %v1642 = vld [vmem:[#allocation2 + $0x118] sm:$0xff]
          %v1643 = vld [vmem:[#allocation2 + $0x120] sm:$0xff]
          %v1644 = vld [vmem:[#allocation2 + $0x128] sm:$0xff]
          %v1645 = vld [vmem:[#allocation2 + $0x130] sm:$0xff]
          %v1646 = vld [vmem:[#allocation2 + $0x138] sm:$0xff]
          %v1647 = vld [vmem:[#allocation2 + $0x140] sm:$0xff]
          %v1648 = vld [vmem:[#allocation2 + $0x148] sm:$0xff]
          %v1649 = vld [vmem:[#allocation2 + $0x150] sm:$0xff]
          %v1650 = vld [vmem:[#allocation2 + $0x158] sm:$0xff]
          %v1651 = vld [vmem:[#allocation2 + $0x160] sm:$0xff]
          %v1652 = vld [vmem:[#allocation2 + $0x168] sm:$0xff]
          %v1653 = vld [vmem:[#allocation2 + $0x170] sm:$0xff]
          %v1654 = vld [vmem:[#allocation2 + $0x178] sm:$0xff]
          %v1655 = vld [vmem:[#allocation2 + $0x180] sm:$0xff]
          %v1656 = vld [vmem:[#allocation2 + $0x188] sm:$0xff]
          %v1657 = vld [vmem:[#allocation2 + $0x190] sm:$0xff]
          %v1658 = vld [vmem:[#allocation2 + $0x198] sm:$0xff]
          %v1659 = vld [vmem:[#allocation2 + $0x1a0] sm:$0xff]
          %v1660 = vld [vmem:[#allocation2 + $0x1a8] sm:$0xff]
          %v1661 = vld [vmem:[#allocation2 + $0x1b0] sm:$0xff]
          %v1662 = vld [vmem:[#allocation2 + $0x1b8] sm:$0xff]
          %v1663 = vld [vmem:[#allocation2 + $0x1c0] sm:$0xff]
          %v1664 = vld [vmem:[#allocation2 + $0x1c8] sm:$0xff]
          %v1665 = vld [vmem:[#allocation2 + $0x1d0] sm:$0xff]
          %v1666 = vld [vmem:[#allocation2 + $0x1d8] sm:$0xff]
          %v1667 = vld [vmem:[#allocation2 + $0x1e0] sm:$0xff]
          %v1668 = vld [vmem:[#allocation2 + $0x1e8] sm:$0xff]
          %v1669 = vld [vmem:[#allocation2 + $0x1f0] sm:$0xff]
          %v1670 = vld [vmem:[#allocation2 + $0x1f8] sm:$0xff]
          %1671 = vmax.xlane.f32.xlu0 %v1607
          %v1672 = vpop.xlane.xlu0 %1671
          %1673 = vmax.xlane.f32.xlu0 %v1608
          %v1674 = vpop.xlane.xlu0 %1673
          %1675 = vmax.xlane.f32.xlu0 %v1609
          %v1676 = vpop.xlane.xlu0 %1675
          %1677 = vmax.xlane.f32.xlu0 %v1610
          %v1678 = vpop.xlane.xlu0 %1677
          %1679 = vmax.xlane.f32.xlu0 %v1611
          %v1680 = vpop.xlane.xlu0 %1679
          %1681 = vmax.xlane.f32.xlu0 %v1612
          %v1682 = vpop.xlane.xlu0 %1681
          %1683 = vmax.xlane.f32.xlu0 %v1613
          %v1684 = vpop.xlane.xlu0 %1683
          %1685 = vmax.xlane.f32.xlu0 %v1614
          %v1686 = vpop.xlane.xlu0 %1685
          %1687 = vmax.xlane.f32.xlu0 %v1615
          %v1688 = vpop.xlane.xlu0 %1687
          %1689 = vmax.xlane.f32.xlu0 %v1616
          %v1690 = vpop.xlane.xlu0 %1689
          %1691 = vmax.xlane.f32.xlu0 %v1617
          %v1692 = vpop.xlane.xlu0 %1691
          %1693 = vmax.xlane.f32.xlu0 %v1618
          %v1694 = vpop.xlane.xlu0 %1693
          %1695 = vmax.xlane.f32.xlu0 %v1619
          %v1696 = vpop.xlane.xlu0 %1695
          %1697 = vmax.xlane.f32.xlu0 %v1620
          %v1698 = vpop.xlane.xlu0 %1697
          %1699 = vmax.xlane.f32.xlu0 %v1621
          %v1700 = vpop.xlane.xlu0 %1699
          %1701 = vmax.xlane.f32.xlu0 %v1622
          %v1702 = vpop.xlane.xlu0 %1701
          %1703 = vmax.xlane.f32.xlu0 %v1623
          %v1704 = vpop.xlane.xlu0 %1703
          %1705 = vmax.xlane.f32.xlu0 %v1624
          %v1706 = vpop.xlane.xlu0 %1705
          %1707 = vmax.xlane.f32.xlu0 %v1625
          %v1708 = vpop.xlane.xlu0 %1707
          %1709 = vmax.xlane.f32.xlu0 %v1626
          %v1710 = vpop.xlane.xlu0 %1709
          %1711 = vmax.xlane.f32.xlu0 %v1627
          %v1712 = vpop.xlane.xlu0 %1711
          %1713 = vmax.xlane.f32.xlu0 %v1628
          %v1714 = vpop.xlane.xlu0 %1713
          %1715 = vmax.xlane.f32.xlu0 %v1629
          %v1716 = vpop.xlane.xlu0 %1715
          %1717 = vmax.xlane.f32.xlu0 %v1630
          %v1718 = vpop.xlane.xlu0 %1717
          %1719 = vmax.xlane.f32.xlu0 %v1631
          %v1720 = vpop.xlane.xlu0 %1719
          %1721 = vmax.xlane.f32.xlu0 %v1632
          %v1722 = vpop.xlane.xlu0 %1721
          %1723 = vmax.xlane.f32.xlu0 %v1633
          %v1724 = vpop.xlane.xlu0 %1723
          %1725 = vmax.xlane.f32.xlu0 %v1634
          %v1726 = vpop.xlane.xlu0 %1725
          %1727 = vmax.xlane.f32.xlu0 %v1635
          %v1728 = vpop.xlane.xlu0 %1727
          %1729 = vmax.xlane.f32.xlu0 %v1636
          %v1730 = vpop.xlane.xlu0 %1729
          %1731 = vmax.xlane.f32.xlu0 %v1637
          %v1732 = vpop.xlane.xlu0 %1731
          %1733 = vmax.xlane.f32.xlu0 %v1638
          %v1734 = vpop.xlane.xlu0 %1733
          %1735 = vmax.xlane.f32.xlu0 %v1639
          %v1736 = vpop.xlane.xlu0 %1735
          %1737 = vmax.xlane.f32.xlu0 %v1640
          %v1738 = vpop.xlane.xlu0 %1737
          %1739 = vmax.xlane.f32.xlu0 %v1641
          %v1740 = vpop.xlane.xlu0 %1739
          %1741 = vmax.xlane.f32.xlu0 %v1642
          %v1742 = vpop.xlane.xlu0 %1741
          %1743 = vmax.xlane.f32.xlu0 %v1643
          %v1744 = vpop.xlane.xlu0 %1743
          %1745 = vmax.xlane.f32.xlu0 %v1644
          %v1746 = vpop.xlane.xlu0 %1745
          %1747 = vmax.xlane.f32.xlu0 %v1645
          %v1748 = vpop.xlane.xlu0 %1747
          %1749 = vmax.xlane.f32.xlu0 %v1646
          %v1750 = vpop.xlane.xlu0 %1749
          %1751 = vmax.xlane.f32.xlu0 %v1647
          %v1752 = vpop.xlane.xlu0 %1751
          %1753 = vmax.xlane.f32.xlu0 %v1648
          %v1754 = vpop.xlane.xlu0 %1753
          %1755 = vmax.xlane.f32.xlu0 %v1649
          %v1756 = vpop.xlane.xlu0 %1755
          %1757 = vmax.xlane.f32.xlu0 %v1650
          %v1758 = vpop.xlane.xlu0 %1757
          %1759 = vmax.xlane.f32.xlu0 %v1651
          %v1760 = vpop.xlane.xlu0 %1759
          %1761 = vmax.xlane.f32.xlu0 %v1652
          %v1762 = vpop.xlane.xlu0 %1761
          %1763 = vmax.xlane.f32.xlu0 %v1653
          %v1764 = vpop.xlane.xlu0 %1763
          %1765 = vmax.xlane.f32.xlu0 %v1654
          %v1766 = vpop.xlane.xlu0 %1765
          %1767 = vmax.xlane.f32.xlu0 %v1655
          %v1768 = vpop.xlane.xlu0 %1767
          %1769 = vmax.xlane.f32.xlu0 %v1656
          %v1770 = vpop.xlane.xlu0 %1769
          %1771 = vmax.xlane.f32.xlu0 %v1657
          %v1772 = vpop.xlane.xlu0 %1771
          %1773 = vmax.xlane.f32.xlu0 %v1658
          %v1774 = vpop.xlane.xlu0 %1773
          %1775 = vmax.xlane.f32.xlu0 %v1659
          %v1776 = vpop.xlane.xlu0 %1775
          %1777 = vmax.xlane.f32.xlu0 %v1660
          %v1778 = vpop.xlane.xlu0 %1777
          %1779 = vmax.xlane.f32.xlu0 %v1661
          %v1780 = vpop.xlane.xlu0 %1779
          %1781 = vmax.xlane.f32.xlu0 %v1662
          %v1782 = vpop.xlane.xlu0 %1781
          %1783 = vmax.xlane.f32.xlu0 %v1663
          %v1784 = vpop.xlane.xlu0 %1783
          %1785 = vmax.xlane.f32.xlu0 %v1664
          %v1786 = vpop.xlane.xlu0 %1785
          %1787 = vmax.xlane.f32.xlu0 %v1665
          %v1788 = vpop.xlane.xlu0 %1787
          %1789 = vmax.xlane.f32.xlu0 %v1666
          %v1790 = vpop.xlane.xlu0 %1789
          %1791 = vmax.xlane.f32.xlu0 %v1667
          %v1792 = vpop.xlane.xlu0 %1791
          %1793 = vmax.xlane.f32.xlu0 %v1668
          %v1794 = vpop.xlane.xlu0 %1793
          %1795 = vmax.xlane.f32.xlu0 %v1669
          %v1796 = vpop.xlane.xlu0 %1795
          %1797 = vmax.xlane.f32.xlu0 %v1670
          %v1798 = vpop.xlane.xlu0 %1797
          %v1799 = vld [vmem:[#allocation6] sm:$0xff]
          %v1800 = vld [vmem:[#allocation6 + $0x8] sm:$0xff]
          %v1801 = vld [vmem:[#allocation6 + $0x10] sm:$0xff]
          %v1802 = vld [vmem:[#allocation6 + $0x18] sm:$0xff]
          %v1803 = vld [vmem:[#allocation6 + $0x20] sm:$0xff]
          %v1804 = vld [vmem:[#allocation6 + $0x28] sm:$0xff]
          %v1805 = vld [vmem:[#allocation6 + $0x30] sm:$0xff]
          %v1806 = vld [vmem:[#allocation6 + $0x38] sm:$0xff]
          %v1807 = vld [vmem:[#allocation8] sm:$0x1]
          %v1809 = vperm.slane %v1807, 0
          %v1875 = vperm.slane %v1672, %v439
          %v1876 = vadd.s32 %v439, 4294967288
          %v1877 = vperm.slane %v1674, %v1876
          %vm1878 = vcmask 130112
          %v1879 = vsel %vm1878, %v1877, %v1875
          %v1880 = vadd.s32 %v439, 4294967280
          %v1881 = vperm.slane %v1676, %v1880
          %vm1882 = vcmask 195712
          %v1883 = vsel %vm1882, %v1881, %v1879
          %v1884 = vadd.s32 %v439, 4294967272
          %v1885 = vperm.slane %v1678, %v1884
          %vm1886 = vcmask 261312
          %v1887 = vsel %vm1886, %v1885, %v1883
          %v1888 = vadd.s32 %v439, 4294967264
          %v1889 = vperm.slane %v1680, %v1888
          %vm1890 = vcmask 326912
          %v1891 = vsel %vm1890, %v1889, %v1887
          %v1892 = vadd.s32 %v439, 4294967256
          %v1893 = vperm.slane %v1682, %v1892
          %vm1894 = vcmask 392512
          %v1895 = vsel %vm1894, %v1893, %v1891
          %v1896 = vadd.s32 %v439, 4294967248
          %v1897 = vperm.slane %v1684, %v1896
          %vm1898 = vcmask 458112
          %v1899 = vsel %vm1898, %v1897, %v1895
          %v1900 = vadd.s32 %v439, 4294967240
          %v1901 = vperm.slane %v1686, %v1900
          %vm1902 = vcmask 523712
          %v1903 = vsel %vm1902, %v1901, %v1899
          %v1904 = vperm.slane %v1688, %v439
          %v1905 = vperm.slane %v1690, %v1876
          %v1906 = vsel %vm1878, %v1905, %v1904
          %v1907 = vperm.slane %v1692, %v1880
          %v1908 = vsel %vm1882, %v1907, %v1906
          %v1909 = vperm.slane %v1694, %v1884
          %v1910 = vsel %vm1886, %v1909, %v1908
          %v1911 = vperm.slane %v1696, %v1888
          %v1912 = vsel %vm1890, %v1911, %v1910
          %v1913 = vperm.slane %v1698, %v1892
          %v1914 = vsel %vm1894, %v1913, %v1912
          %v1915 = vperm.slane %v1700, %v1896
          %v1916 = vsel %vm1898, %v1915, %v1914
          %v1917 = vperm.slane %v1702, %v1900
          %v1918 = vsel %vm1902, %v1917, %v1916
          %v1919 = vperm.slane %v1704, %v439
          %v1920 = vperm.slane %v1706, %v1876
          %v1921 = vsel %vm1878, %v1920, %v1919
          %v1922 = vperm.slane %v1708, %v1880
          %v1923 = vsel %vm1882, %v1922, %v1921
          %v1924 = vperm.slane %v1710, %v1884
          %v1925 = vsel %vm1886, %v1924, %v1923
          %v1926 = vperm.slane %v1712, %v1888
          %v1927 = vsel %vm1890, %v1926, %v1925
          %v1928 = vperm.slane %v1714, %v1892
          %v1929 = vsel %vm1894, %v1928, %v1927
          %v1930 = vperm.slane %v1716, %v1896
          %v1931 = vsel %vm1898, %v1930, %v1929
          %v1932 = vperm.slane %v1718, %v1900
          %v1933 = vsel %vm1902, %v1932, %v1931
          %v1934 = vperm.slane %v1720, %v439
          %v1935 = vperm.slane %v1722, %v1876
          %v1936 = vsel %vm1878, %v1935, %v1934
          %v1937 = vperm.slane %v1724, %v1880
          %v1938 = vsel %vm1882, %v1937, %v1936
          %v1939 = vperm.slane %v1726, %v1884
          %v1940 = vsel %vm1886, %v1939, %v1938
          %v1941 = vperm.slane %v1728, %v1888
          %v1942 = vsel %vm1890, %v1941, %v1940
          %v1943 = vperm.slane %v1730, %v1892
          %v1944 = vsel %vm1894, %v1943, %v1942
          %v1945 = vperm.slane %v1732, %v1896
          %v1946 = vsel %vm1898, %v1945, %v1944
          %v1947 = vperm.slane %v1734, %v1900
          %v1948 = vsel %vm1902, %v1947, %v1946
          %v1949 = vperm.slane %v1736, %v439
          %v1950 = vperm.slane %v1738, %v1876
          %v1951 = vsel %vm1878, %v1950, %v1949
          %v1952 = vperm.slane %v1740, %v1880
          %v1953 = vsel %vm1882, %v1952, %v1951
          %v1954 = vperm.slane %v1742, %v1884
          %v1955 = vsel %vm1886, %v1954, %v1953
          %v1956 = vperm.slane %v1744, %v1888
          %v1957 = vsel %vm1890, %v1956, %v1955
          %v1958 = vperm.slane %v1746, %v1892
          %v1959 = vsel %vm1894, %v1958, %v1957
          %v1960 = vperm.slane %v1748, %v1896
          %v1961 = vsel %vm1898, %v1960, %v1959
          %v1962 = vperm.slane %v1750, %v1900
          %v1963 = vsel %vm1902, %v1962, %v1961
          %v1964 = vperm.slane %v1752, %v439
          %v1965 = vperm.slane %v1754, %v1876
          %v1966 = vsel %vm1878, %v1965, %v1964
          %v1967 = vperm.slane %v1756, %v1880
          %v1968 = vsel %vm1882, %v1967, %v1966
          %v1969 = vperm.slane %v1758, %v1884
          %v1970 = vsel %vm1886, %v1969, %v1968
          %v1971 = vperm.slane %v1760, %v1888
          %v1972 = vsel %vm1890, %v1971, %v1970
          %v1973 = vperm.slane %v1762, %v1892
          %v1974 = vsel %vm1894, %v1973, %v1972
          %v1975 = vperm.slane %v1764, %v1896
          %v1976 = vsel %vm1898, %v1975, %v1974
          %v1977 = vperm.slane %v1766, %v1900
          %v1978 = vsel %vm1902, %v1977, %v1976
          %v1979 = vperm.slane %v1768, %v439
          %v1980 = vperm.slane %v1770, %v1876
          %v1981 = vsel %vm1878, %v1980, %v1979
          %v1982 = vperm.slane %v1772, %v1880
          %v1983 = vsel %vm1882, %v1982, %v1981
          %v1984 = vperm.slane %v1774, %v1884
          %v1985 = vsel %vm1886, %v1984, %v1983
          %v1986 = vperm.slane %v1776, %v1888
          %v1987 = vsel %vm1890, %v1986, %v1985
          %v1988 = vperm.slane %v1778, %v1892
          %v1989 = vsel %vm1894, %v1988, %v1987
          %v1990 = vperm.slane %v1780, %v1896
          %v1991 = vsel %vm1898, %v1990, %v1989
          %v1992 = vperm.slane %v1782, %v1900
          %v1993 = vsel %vm1902, %v1992, %v1991
          %v1994 = vperm.slane %v1784, %v439
          %v1995 = vperm.slane %v1786, %v1876
          %v1996 = vsel %vm1878, %v1995, %v1994
          %v1997 = vperm.slane %v1788, %v1880
          %v1998 = vsel %vm1882, %v1997, %v1996
          %v1999 = vperm.slane %v1790, %v1884
          %v2000 = vsel %vm1886, %v1999, %v1998
          %v2001 = vperm.slane %v1792, %v1888
          %v2002 = vsel %vm1890, %v2001, %v2000
          %v2003 = vperm.slane %v1794, %v1892
          %v2004 = vsel %vm1894, %v2003, %v2002
          %v2005 = vperm.slane %v1796, %v1896
          %v2006 = vsel %vm1898, %v2005, %v2004
          %v2007 = vperm.slane %v1798, %v1900
          %v2008 = vsel %vm1902, %v2007, %v2006
          %vm2009 = vcmask 1041409
          %v2010 = vsel %vm2009, %v1918, %v1903
          %vm2011 = vcmask 1042434
          %v2012 = vsel %vm2011, %v1933, %v2010
          %vm2013 = vcmask 1043459
          %v2014 = vsel %vm2013, %v1948, %v2012
          %vm2015 = vcmask 1044484
          %v2016 = vsel %vm2015, %v1963, %v2014
          %vm2017 = vcmask 1045509
          %v2018 = vsel %vm2017, %v1978, %v2016
          %vm2019 = vcmask 1046534
          %v2020 = vsel %vm2019, %v1993, %v2018
          %vm2021 = vcmask 1047559
          %v2022 = vsel %vm2021, %v2008, %v2020
          %vm2023 = vcmask 523264
          %v2024 = vsel %vm2023, %v2022, 0
          %2026 = vmatpush.msra.mxu0 0.0
          %2027 = vmatpush.msra.mxu0 0.0
          %2028 = vmatpush.msra.mxu0 0.0
          %2029 = vmatpush.msra.mxu0 0.0
          %2030 = vmatpush.msra.mxu0 0.0
          %2031 = vmatpush.msra.mxu0 0.0
          %2032 = vmatpush.msra.mxu0 0.0
          %2033 = vmatpush.msra.mxu0 0.0
          %2034 = vmatpush.msra.mxu0 %v1806
          %2035 = vmatpush.msra.mxu0 %v1805
          %2036 = vmatpush.msra.mxu0 %v1804
          %2037 = vmatpush.msra.mxu0 %v1803
          %2038 = vmatpush.msra.mxu0 %v1802
          %2039 = vmatpush.msra.mxu0 %v1801
          %2040 = vmatpush.msra.mxu0 %v1800
          %2041 = vmatpush.msra.mxu0 %v1799
          %2042 = vmatmul.f32.gmra.mxu0 %v2024
          %v2043 = vpop.f32.mrf.mxu0
          %v2044 = vadd.f32 %v1809, %v2043
          %2045 = vdwg.mxu0
          %2046 = vst [vmem:[%s238] sm:$0xff] %v2044
        $region52: #{tpu_custom_call.1} parent=31 // pred_fallthru
          _
        %s2047 = sand.u32 %s111, 1
        %s2048 = scalar_lea.sflag [#allocation5], %s2047
        %s2049 = sand.u32 %s111, 1
        %s2050 = smul.addr %s2049, 8
        %s2051 = scalar_lea.vmem [#allocation9], %s2050
        // Predicated region
        $region53: #{tpu_custom_call.1} parent=31 // pred_check
          %p2052 = pneg %p121
        $region54: #{tpu_custom_call.1} parent=31 // pred_check_branch
          %2054 = sbr.rel (%p2052) target = $region56
        $region55: #{tpu_custom_call.1} parent=31 // pred_region
          %2056 = vsyncadd %s2048, 0
          %s2057 = smul.addr %s25, 8
          %s2058 = scalar_lea.hbm %s3, %s2057
          %s2060 = sshll.u32 %s2051, 4
          %s2061 = int_to_ptr.vmem [resolvable:$true] %s2060
          %s2062 = sshll.u32 %s2058, 4
          %s2063 = int_to_ptr.hbm [resolvable:$true] %s2062
          %2065 = dma.vmem_to_hbm [thread:$0]  %s2061, 128, %s2063, %s2048
        $region56: #{tpu_custom_call.1} parent=31 // pred_fallthru
          _
      $region32: #{tpu_custom_call.1} parent=5 // pred_fallthru
        _
      %p2066 = scmp.le.s32.totalorder 2, %s16
      // Predicated region
      $region57: #{tpu_custom_call.1} parent=5 // pred_check
        %p2067 = pneg %p2066
      $region58: #{tpu_custom_call.1} parent=5 // pred_check_branch
        %2069 = sbr.rel (%p2067) target = $region60
      $region59: #{tpu_custom_call.1} parent=5 // pred_region
        %s2070 = ssub.s32 %s16, 2
        // Predicated region
        $region61: #{tpu_custom_call.1} parent=59 // pred_check
          %p2071 = pneg %p127
        $region62: #{tpu_custom_call.1} parent=59 // pred_check_branch
          %2073 = sbr.rel (%p2071) target = $region64
        $region63: #{tpu_custom_call.1} parent=59 // pred_region
          %s2074 = sand.u32 %s112, 1
          %s2075 = scalar_lea.sflag [#allocation5], %s2074
          %s2076 = sand.u32 %s112, 1
          %s2077 = smul.addr %s2076, 8
          %s2078 = scalar_lea.vmem [#allocation9], %s2077
          %2080 = dma.done %s2075, 128
        $region64: #{tpu_custom_call.1} parent=59 // pred_fallthru
          _
      $region60: #{tpu_custom_call.1} parent=5 // pred_fallthru
        _
    $region6: #{tpu_custom_call.1} parent=1 // loop_footer
      %s20 = sadd.s32 1, %s16
    $region7: #{tpu_custom_call.1} parent=1 // loop_footer_branch
      %15 = sbr.rel target = $region3
    $region8: #{tpu_custom_call.1} parent=1 // loop_exit
      _
    %2081 = vsyncpa [#allocation4], 1
    %s2082 = scalar_lea.sflag [#allocation4], 1
    %2083 = vsyncpa %s2082, 1
    %2084 = vsyncpa [#allocation7], 1
    %2085 = vsyncpa [#allocation5], 1
    %s2086 = scalar_lea.sflag [#allocation5], 1
    %2087 = vsyncpa %s2086, 1

</llo_original>
